<compile_context>
chip_gen: v7x
topology: tpu7x:2x2x1
jax: 0.10.0
libtpu: 0.0.40
codegen_flags: <defaults>
</compile_context>

<pallas_src>
import math

import jax
import jax.numpy as jnp
from jax.experimental import pallas as pl
from jax.experimental.pallas import tpu as pltpu

# ----------------- small synthetic "albert-base-v2-like" config -----------------
VOCAB = 100        # vocab_size
TYPE_VOCAB = 2     # type_vocab_size
MAX_POS = 64       # max_position_embeddings
EMB = 16           # embedding_size
HIDDEN = 32        # hidden_size
HEADS = 4          # num_attention_heads
HEAD_DIM = HIDDEN // HEADS
INTER = 64         # intermediate_size
LAYERS = 2         # num_hidden_layers == num_hidden_groups (unshared layers)
EPS = 1e-12        # layer_norm_eps
NEG_INF = -1e9     # large-but-safe additive mask value


# ------------------------------ in-kernel helpers ------------------------------
def _mxu_dot(a, b):
    """Matmul with bf16 operands and f32 accumulation (MXU-native rate).
    Weights are already stored as bf16, so only the activation cast remains."""
    return jnp.dot(a.astype(jnp.bfloat16), b.astype(jnp.bfloat16),
                   preferred_element_type=jnp.float32)


def _mxu_dot_nt(a, b):
    """a [m,k] x b[n,k]^T -> [m,n] without an explicit transpose op."""
    return jax.lax.dot_general(
        a.astype(jnp.bfloat16), b.astype(jnp.bfloat16),
        dimension_numbers=(((1,), (1,)), ((), ())),
        preferred_element_type=jnp.float32)


def _layernorm(x, g, b):
    mean = jnp.mean(x, axis=-1, keepdims=True)
    var = jnp.mean(jnp.square(x - mean), axis=-1, keepdims=True)
    return (x - mean) * jax.lax.rsqrt(var + EPS) * g + b


def _gelu_new(x):
    c = math.sqrt(2.0 / math.pi)
    return 0.5 * x * (1.0 + jnp.tanh(c * (x + 0.044715 * x * x * x)))


# --------------------------------- fused kernel ---------------------------------
def _albert_kernel(emb_ref, bias_ref,
                   eln_g_ref, eln_b_ref, emap_w_ref, emap_b_ref,
                   qkv_w_ref, qkv_b_ref,
                   ao_w_ref, ao_b_ref, a_ln_g_ref, a_ln_b_ref,
                   ffn_w_ref, ffn_b_ref, fo_w_ref, fo_b_ref,
                   f_ln_g_ref, f_ln_b_ref,
                   out_ref):
    """Grid = (row_tile, layer).  out_ref's block index is constant along the layer
    axis, so it stays resident in VMEM and doubles as the hidden-state accumulator."""
    layer = pl.program_id(1)

    # ---- layer 0: embedding LayerNorm + embedding_hidden_mapping_in (fused) ----
    @pl.when(layer == 0)
    def _init():
        e = _layernorm(emb_ref[...], eln_g_ref[...], eln_b_ref[...])      # [R, EMB]
        out_ref[...] = _mxu_dot(e, emap_w_ref[...]) + emap_b_ref[...]     # [R, HIDDEN]

    h = out_ref[...]                                                      # [R, HIDDEN] f32

    # ---- fused QKV projection (Q columns pre-scaled by 1/sqrt(head_dim)) ----
    qkv = _mxu_dot(h, qkv_w_ref[...]) + qkv_b_ref[...]                    # [R, 3*HIDDEN]
    q = qkv[:, 0:HIDDEN]
    k = qkv[:, HIDDEN:2 * HIDDEN]
    v = qkv[:, 2 * HIDDEN:3 * HIDDEN]

    bias = bias_ref[...]                                                  # [R, R] block-diag mask
    ao_w = ao_w_ref[...]                                                  # [HIDDEN, HIDDEN] bf16

    # ---- per-head attention; head context folded straight into the output proj ----
    proj = jnp.zeros((h.shape[0], HIDDEN), jnp.float32)
    for hh in range(HEADS):
        s0 = hh * HEAD_DIM
        qh = q[:, s0:s0 + HEAD_DIM]                                       # [R, D]
        kh = k[:, s0:s0 + HEAD_DIM]
        vh = v[:, s0:s0 + HEAD_DIM]
        sc = _mxu_dot_nt(qh, kh) + bias                                   # [R, R] f32
        m = jnp.max(sc, axis=-1, keepdims=True)
        p = jnp.exp(sc - m)
        p = p * pl.reciprocal(jnp.sum(p, axis=-1, keepdims=True), approx=True)
        ctx_h = _mxu_dot(p, vh)                                           # [R, D]
        # equivalent to concat(ctx_h) @ W_o, without the lane concat:
        proj = proj + _mxu_dot(ctx_h, ao_w[s0:s0 + HEAD_DIM, :])          # [R, HIDDEN]
    proj = proj + ao_b_ref[...]

    # ---- attention residual + LayerNorm ----
    attn_out = _layernorm(proj + h, a_ln_g_ref[...], a_ln_b_ref[...])

    # ---- FFN: dense + gelu_new + dense + residual + LayerNorm (fused) ----
    ff = _gelu_new(_mxu_dot(attn_out, ffn_w_ref[...]) + ffn_b_ref[...])   # [R, INTER]
    ff = _mxu_dot(ff, fo_w_ref[...]) + fo_b_ref[...]                      # [R, HIDDEN]
    out_ref[...] = _layernorm(ff + attn_out, f_ln_g_ref[...], f_ln_b_ref[...])


# ------------------------------ parameter setup ------------------------------
def init_params(key):
    def normal(k, shape, std=0.02):
        return std * jax.random.normal(k, shape, dtype=jnp.float32)

    def w16(x):  # matmul weights live in HBM as bf16
        return x.astype(jnp.bfloat16)

    ks = iter(jax.random.split(key, 16))

    qkv_w = normal(next(ks), (LAYERS, HIDDEN, 3 * HIDDEN))
    qkv_b = jnp.zeros((LAYERS, 1, 3 * HIDDEN), jnp.float32)
    # fold 1/sqrt(head_dim) into the Q columns (one-time, host side)
    q_scale = jnp.concatenate([
        jnp.full((HIDDEN,), 1.0 / math.sqrt(HEAD_DIM), jnp.float32),
        jnp.ones((2 * HIDDEN,), jnp.float32)])
    qkv_w = qkv_w * q_scale[None, None, :]
    qkv_b = qkv_b * q_scale[None, None, :]

    params = {
        "word_emb": normal(next(ks), (VOCAB, EMB)),
        "pos_emb": normal(next(ks), (MAX_POS, EMB)),
        "tok_emb": normal(next(ks), (TYPE_VOCAB, EMB)),
        "emb_ln_g": jnp.ones((1, EMB), jnp.float32),
        "emb_ln_b": jnp.zeros((1, EMB), jnp.float32),
        "emb_map_w": w16(normal(next(ks), (EMB, HIDDEN))),
        "emb_map_b": jnp.zeros((1, HIDDEN), jnp.float32),
        # per-layer (unshared) weights, stacked along a leading LAYERS axis
        "qkv_w": w16(qkv_w),
        "qkv_b": qkv_b,
        "attn_out_w": w16(normal(next(ks), (LAYERS, HIDDEN, HIDDEN))),
        "attn_out_b": jnp.zeros((LAYERS, 1, HIDDEN), jnp.float32),
        "attn_ln_g": jnp.ones((LAYERS, 1, HIDDEN), jnp.float32),
        "attn_ln_b": jnp.zeros((LAYERS, 1, HIDDEN), jnp.float32),
        "ffn_w": w16(normal(next(ks), (LAYERS, HIDDEN, INTER))),
        "ffn_b": jnp.zeros((LAYERS, 1, INTER), jnp.float32),
        "ffn_out_w": w16(normal(next(ks), (LAYERS, INTER, HIDDEN))),
        "ffn_out_b": jnp.zeros((LAYERS, 1, HIDDEN), jnp.float32),
        "ffn_ln_g": jnp.ones((LAYERS, 1, HIDDEN), jnp.float32),
        "ffn_ln_b": jnp.zeros((LAYERS, 1, HIDDEN), jnp.float32),
    }
    return params


# ------------------------------ model forward ------------------------------
def albert_unshared_forward(params, input_ids, token_type_ids, attention_mask):
    """Returns the last hidden state [B, S, HIDDEN] (== output[0] of AlbertModel)."""
    B, S = input_ids.shape
    R = B * S                      # all batch rows packed into one row block
    ROW_TILES = 1
    R_TILE = R

    # --- embeddings: gathers are plain-JAX glue; LN + mapping run inside the kernel ---
    emb = (
        jnp.take(params["word_emb"], input_ids, axis=0)
        + params["pos_emb"][None, :S, :]
        + jnp.take(params["tok_emb"], token_type_ids, axis=0)
    ).reshape(R, EMB)

    # --- packed block-diagonal attention bias [1, R, R]:
    #     query i may attend key j iff same sequence AND attention_mask[j] == 1 ---
    batch_id = jnp.repeat(jnp.arange(B, dtype=jnp.int32), S)              # [R]
    same_seq = batch_id[:, None] == batch_id[None, :]                     # [R, R]
    key_ok = attention_mask.reshape(R) > 0                                # [R]
    bias = jnp.where(same_seq & key_ok[None, :], 0.0, NEG_INF)
    bias = bias.astype(jnp.float32)[None, :, :]                           # [1, R, R]

    def rows_spec(cols):                      # packed activation rows
        return pl.BlockSpec((R_TILE, cols), lambda t, l: (t, 0))

    def const_spec(r, c):                     # shared (layer-independent) weight
        return pl.BlockSpec((r, c), lambda t, l: (0, 0))

    def layer_spec(r, c):                     # layer-indexed stacked weight
        return pl.BlockSpec((None, r, c), lambda t, l: (l, 0, 0))

    in_specs = [
        rows_spec(EMB),                                                 # emb
        pl.BlockSpec((None, R_TILE, R_TILE), lambda t, l: (t, 0, 0)),   # packed bias
        const_spec(1, EMB), const_spec(1, EMB),                         # emb LN g/b
        const_spec(EMB, HIDDEN), const_spec(1, HIDDEN),                 # emb_map w/b
        layer_spec(HIDDEN, 3 * HIDDEN), layer_spec(1, 3 * HIDDEN),      # fused qkv w/b
        layer_spec(HIDDEN, HIDDEN), layer_spec(1, HIDDEN),              # attn out w/b
        layer_spec(1, HIDDEN), layer_spec(1, HIDDEN),                   # attn LN g/b
        layer_spec(HIDDEN, INTER), layer_spec(1, INTER),                # ffn w/b
        layer_spec(INTER, HIDDEN), layer_spec(1, HIDDEN),               # ffn out w/b
        layer_spec(1, HIDDEN), layer_spec(1, HIDDEN),                   # ffn LN g/b
    ]

    out = pl.pallas_call(
        _albert_kernel,
        out_shape=jax.ShapeDtypeStruct((R, HIDDEN), jnp.float32),
        grid_spec=pltpu.PrefetchScalarGridSpec(
            num_scalar_prefetch=0,
            grid=(ROW_TILES, LAYERS),
            in_specs=in_specs,
            out_specs=pl.BlockSpec((R_TILE, HIDDEN), lambda t, l: (t, 0)),
        ),
        compiler_params=pltpu.CompilerParams(
            dimension_semantics=("parallel", "arbitrary"),
            vmem_limit_bytes=48 * 1024 * 1024),   # headroom under v7x's 64 MiB VMEM
    )(emb, bias,
      params["emb_ln_g"], params["emb_ln_b"],
      params["emb_map_w"], params["emb_map_b"],
      params["qkv_w"], params["qkv_b"],
      params["attn_out_w"], params["attn_out_b"],
      params["attn_ln_g"], params["attn_ln_b"],
      params["ffn_w"], params["ffn_b"],
      params["ffn_out_w"], params["ffn_out_b"],
      params["ffn_ln_g"], params["ffn_ln_b"])

    # dropout probs are 0.0 in albert-base-v2 -> identity; output[0] == sequence output
    return out.reshape(B, S, HIDDEN)


# ------------------------------------ main ------------------------------------
if __name__ == "__main__":
    key = jax.random.PRNGKey(0)
    kp, kx, ks = jax.random.split(key, 3)

    B, S = 2, 8
    params = init_params(kp)

    x = jax.random.randint(kx, (B, S), 0, VOCAB, dtype=jnp.int32)          # input_ids
    segs = jax.random.randint(ks, (B, S), 0, TYPE_VOCAB, dtype=jnp.int32)  # token_type_ids
    mask = jnp.ones((B, S), jnp.int32).at[1, S - 2:].set(0)                # attention_mask

    out = jax.jit(albert_unshared_forward)(params, x, segs, mask)
    out = jax.block_until_ready(out)
    assert out.shape == (B, S, HIDDEN) and bool(jnp.all(jnp.isfinite(out)))
    print("KERNEL_OK")
</pallas_src>

<mosaic_0001>
module attributes {stable_mosaic.version = 11 : i64} {
  func.func @_albert_kernel(%arg0: i32, %arg1: i32, %arg2: memref<16x16xf32, #tpu.memory_space<vmem>>, %arg3: memref<1x16x16xf32, #tpu.memory_space<vmem>>, %arg4: memref<1x16xf32, #tpu.memory_space<vmem>>, %arg5: memref<1x16xf32, #tpu.memory_space<vmem>>, %arg6: memref<16x32xbf16, #tpu.memory_space<vmem>>, %arg7: memref<1x32xf32, #tpu.memory_space<vmem>>, %arg8: memref<1x32x96xbf16, #tpu.memory_space<vmem>>, %arg9: memref<1x1x96xf32, #tpu.memory_space<vmem>>, %arg10: memref<1x32x32xbf16, #tpu.memory_space<vmem>>, %arg11: memref<1x1x32xf32, #tpu.memory_space<vmem>>, %arg12: memref<1x1x32xf32, #tpu.memory_space<vmem>>, %arg13: memref<1x1x32xf32, #tpu.memory_space<vmem>>, %arg14: memref<1x32x64xbf16, #tpu.memory_space<vmem>>, %arg15: memref<1x1x64xf32, #tpu.memory_space<vmem>>, %arg16: memref<1x64x32xbf16, #tpu.memory_space<vmem>>, %arg17: memref<1x1x32xf32, #tpu.memory_space<vmem>>, %arg18: memref<1x1x32xf32, #tpu.memory_space<vmem>>, %arg19: memref<1x1x32xf32, #tpu.memory_space<vmem>>, %arg20: memref<16x32xf32, #tpu.memory_space<vmem>>) attributes {dimension_semantics = [#tpu.dimension_semantics<parallel>, #tpu.dimension_semantics<arbitrary>], iteration_bounds = array<i64: 1, 2>, scalar_prefetch = 0 : i64, scratch_operands = 0 : i64, tpu.core_type = #tpu.core_type<tc>, window_params = [{transform_indices = @transform_0, window_bounds = array<i64: 16, 16>}, {transform_indices = @transform_1, window_bounds = array<i64: 1, 16, 16>}, {pipeline_mode = #tpu.pipeline_mode<synchronous>, transform_indices = @transform_2, window_bounds = array<i64: 1, 16>}, {pipeline_mode = #tpu.pipeline_mode<synchronous>, transform_indices = @transform_3, window_bounds = array<i64: 1, 16>}, {pipeline_mode = #tpu.pipeline_mode<synchronous>, transform_indices = @transform_4, window_bounds = array<i64: 16, 32>}, {pipeline_mode = #tpu.pipeline_mode<synchronous>, transform_indices = @transform_5, window_bounds = array<i64: 1, 32>}, {transform_indices = @transform_6, window_bounds = array<i64: 1, 32, 96>}, {transform_indices = @transform_7, window_bounds = array<i64: 1, 1, 96>}, {transform_indices = @transform_8, window_bounds = array<i64: 1, 32, 32>}, {transform_indices = @transform_9, window_bounds = array<i64: 1, 1, 32>}, {transform_indices = @transform_10, window_bounds = array<i64: 1, 1, 32>}, {transform_indices = @transform_11, window_bounds = array<i64: 1, 1, 32>}, {transform_indices = @transform_12, window_bounds = array<i64: 1, 32, 64>}, {transform_indices = @transform_13, window_bounds = array<i64: 1, 1, 64>}, {transform_indices = @transform_14, window_bounds = array<i64: 1, 64, 32>}, {transform_indices = @transform_15, window_bounds = array<i64: 1, 1, 32>}, {transform_indices = @transform_16, window_bounds = array<i64: 1, 1, 32>}, {transform_indices = @transform_17, window_bounds = array<i64: 1, 1, 32>}, {transform_indices = @transform_18, window_bounds = array<i64: 16, 32>}]} {
    %c0_i32 = arith.constant 0 : i32
    %0 = arith.cmpi eq, %arg1, %c0_i32 : i32
    %1 = arith.extui %0 : i1 to i32
    %c0_i32_0 = arith.constant 0 : i32
    %2 = arith.cmpi ne, %1, %c0_i32_0 : i32
    scf.if %2 {
      %c0_80 = arith.constant 0 : index
      %c0_81 = arith.constant 0 : index
      %204 = vector.load %arg2[%c0_80, %c0_81] : memref<16x16xf32, #tpu.memory_space<vmem>>, vector<16x16xf32>
      %c0_82 = arith.constant 0 : index
      %c0_83 = arith.constant 0 : index
      %205 = vector.load %arg4[%c0_82, %c0_83] : memref<1x16xf32, #tpu.memory_space<vmem>>, vector<1x16xf32>
      %c0_84 = arith.constant 0 : index
      %c0_85 = arith.constant 0 : index
      %206 = vector.load %arg5[%c0_84, %c0_85] : memref<1x16xf32, #tpu.memory_space<vmem>>, vector<1x16xf32>
      %cst_86 = arith.constant dense<0.000000e+00> : vector<16xf32>
      %207 = vector.multi_reduction <add>, %204, %cst_86 [1] : vector<16x16xf32> to vector<16xf32>
      %208 = vector.shape_cast %207 : vector<16xf32> to vector<16x1xf32>
      %cst_87 = arith.constant 1.600000e+01 : f32
      %209 = vector.broadcast %cst_87 : f32 to vector<16x1xf32>
      %210 = arith.divf %208, %209 : vector<16x1xf32>
      %211 = vector.broadcast %210 : vector<16x1xf32> to vector<16x16xf32>
      %212 = arith.subf %204, %211 : vector<16x16xf32>
      %213 = arith.mulf %212, %212 : vector<16x16xf32>
      %cst_88 = arith.constant dense<0.000000e+00> : vector<16xf32>
      %214 = vector.multi_reduction <add>, %213, %cst_88 [1] : vector<16x16xf32> to vector<16xf32>
      %215 = vector.shape_cast %214 : vector<16xf32> to vector<16x1xf32>
      %cst_89 = arith.constant 1.600000e+01 : f32
      %216 = vector.broadcast %cst_89 : f32 to vector<16x1xf32>
      %217 = arith.divf %215, %216 : vector<16x1xf32>
      %218 = vector.broadcast %210 : vector<16x1xf32> to vector<16x16xf32>
      %219 = arith.subf %204, %218 : vector<16x16xf32>
      %cst_90 = arith.constant 9.99999996E-13 : f32
      %220 = vector.broadcast %cst_90 : f32 to vector<16x1xf32>
      %221 = arith.addf %217, %220 : vector<16x1xf32>
      %222 = math.rsqrt %221 : vector<16x1xf32>
      %223 = vector.broadcast %222 : vector<16x1xf32> to vector<16x16xf32>
      %224 = arith.mulf %219, %223 : vector<16x16xf32>
      %225 = vector.broadcast %205 : vector<1x16xf32> to vector<16x16xf32>
      %226 = arith.mulf %224, %225 : vector<16x16xf32>
      %227 = vector.broadcast %206 : vector<1x16xf32> to vector<16x16xf32>
      %228 = arith.addf %226, %227 : vector<16x16xf32>
      %c0_91 = arith.constant 0 : index
      %c0_92 = arith.constant 0 : index
      %229 = vector.load %arg6[%c0_91, %c0_92] : memref<16x32xbf16, #tpu.memory_space<vmem>>, vector<16x32xbf16>
      %230 = arith.truncf %228 : vector<16x16xf32> to vector<16x16xbf16>
      %cst_93 = arith.constant dense<0.000000e+00> : vector<16x32xf32>
      %231 = tpu.matmul %230, %229, %cst_93 {dimension_numbers = #tpu.dot_dimension_numbers<[1], [0], [0], [1], [0, 0, 1, 1], [], []>} : vector<16x16xbf16>, vector<16x32xbf16>, vector<16x32xf32> -> vector<16x32xf32>
      %c0_94 = arith.constant 0 : index
      %c0_95 = arith.constant 0 : index
      %232 = vector.load %arg7[%c0_94, %c0_95] : memref<1x32xf32, #tpu.memory_space<vmem>>, vector<1x32xf32>
      %233 = vector.broadcast %232 : vector<1x32xf32> to vector<16x32xf32>
      %234 = arith.addf %231, %233 : vector<16x32xf32>
      %c0_96 = arith.constant 0 : index
      %c0_97 = arith.constant 0 : index
      %235 = vector.load %arg20[%c0_96, %c0_97] : memref<16x32xf32, #tpu.memory_space<vmem>>, vector<16x32xf32>
      tpu.vector_store %arg20[%c0_96, %c0_97], %234 {strides = array<i32>} : memref<16x32xf32, #tpu.memory_space<vmem>>, vector<16x32xf32>,
    } else {
    }
    %c0 = arith.constant 0 : index
    %c0_1 = arith.constant 0 : index
    %3 = vector.load %arg20[%c0, %c0_1] : memref<16x32xf32, #tpu.memory_space<vmem>>, vector<16x32xf32>
    %c0_2 = arith.constant 0 : index
    %c0_3 = arith.constant 0 : index
    %c0_4 = arith.constant 0 : index
    %4 = vector.load %arg8[%c0_2, %c0_3, %c0_4] : memref<1x32x96xbf16, #tpu.memory_space<vmem>>, vector<1x32x96xbf16>
    %5 = vector.shape_cast %4 : vector<1x32x96xbf16> to vector<32x96xbf16>
    %6 = arith.truncf %3 : vector<16x32xf32> to vector<16x32xbf16>
    %cst = arith.constant dense<0.000000e+00> : vector<16x96xf32>
    %7 = tpu.matmul %6, %5, %cst {dimension_numbers = #tpu.dot_dimension_numbers<[1], [0], [0], [1], [0, 0, 1, 1], [], []>} : vector<16x32xbf16>, vector<32x96xbf16>, vector<16x96xf32> -> vector<16x96xf32>
    %c0_5 = arith.constant 0 : index
    %c0_6 = arith.constant 0 : index
    %c0_7 = arith.constant 0 : index
    %8 = vector.load %arg9[%c0_5, %c0_6, %c0_7] : memref<1x1x96xf32, #tpu.memory_space<vmem>>, vector<1x1x96xf32>
    %9 = vector.shape_cast %8 : vector<1x1x96xf32> to vector<1x96xf32>
    %10 = vector.broadcast %9 : vector<1x96xf32> to vector<16x96xf32>
    %11 = arith.addf %7, %10 : vector<16x96xf32>
    %12 = vector.extract_strided_slice %11 {offsets = [0, 0], sizes = [16, 32], strides = [1, 1]} : vector<16x96xf32> to vector<16x32xf32>
    %13 = vector.extract_strided_slice %11 {offsets = [0, 32], sizes = [16, 32], strides = [1, 1]} : vector<16x96xf32> to vector<16x32xf32>
    %14 = vector.extract_strided_slice %11 {offsets = [0, 64], sizes = [16, 32], strides = [1, 1]} : vector<16x96xf32> to vector<16x32xf32>
    %c0_8 = arith.constant 0 : index
    %c0_9 = arith.constant 0 : index
    %c0_10 = arith.constant 0 : index
    %15 = vector.load %arg3[%c0_8, %c0_9, %c0_10] : memref<1x16x16xf32, #tpu.memory_space<vmem>>, vector<1x16x16xf32>
    %16 = vector.shape_cast %15 : vector<1x16x16xf32> to vector<16x16xf32>
    %c0_11 = arith.constant 0 : index
    %c0_12 = arith.constant 0 : index
    %c0_13 = arith.constant 0 : index
    %17 = vector.load %arg10[%c0_11, %c0_12, %c0_13] : memref<1x32x32xbf16, #tpu.memory_space<vmem>>, vector<1x32x32xbf16>
    %18 = vector.shape_cast %17 : vector<1x32x32xbf16> to vector<32x32xbf16>
    %cst_14 = arith.constant 0.000000e+00 : f32
    %19 = vector.broadcast %cst_14 : f32 to vector<16x32xf32>
    %20 = vector.extract_strided_slice %12 {offsets = [0, 0], sizes = [16, 8], strides = [1, 1]} : vector<16x32xf32> to vector<16x8xf32>
    %21 = vector.extract_strided_slice %13 {offsets = [0, 0], sizes = [16, 8], strides = [1, 1]} : vector<16x32xf32> to vector<16x8xf32>
    %22 = vector.extract_strided_slice %14 {offsets = [0, 0], sizes = [16, 8], strides = [1, 1]} : vector<16x32xf32> to vector<16x8xf32>
    %23 = arith.truncf %20 : vector<16x8xf32> to vector<16x8xbf16>
    %24 = arith.truncf %21 : vector<16x8xf32> to vector<16x8xbf16>
    %cst_15 = arith.constant dense<0.000000e+00> : vector<16x16xf32>
    %25 = tpu.matmul %23, %24, %cst_15 {dimension_numbers = #tpu.dot_dimension_numbers<[1], [1], [0], [0], [0, 0, 1, 0], [], []>} : vector<16x8xbf16>, vector<16x8xbf16>, vector<16x16xf32> -> vector<16x16xf32>
    %26 = arith.addf %25, %16 : vector<16x16xf32>
    %cst_16 = arith.constant dense<0xFF800000> : vector<16xf32>
    %27 = vector.multi_reduction <maximumf>, %26, %cst_16 [1] : vector<16x16xf32> to vector<16xf32>
    %28 = vector.shape_cast %27 : vector<16xf32> to vector<16x1xf32>
    %29 = vector.broadcast %28 : vector<16x1xf32> to vector<16x16xf32>
    %30 = arith.subf %26, %29 : vector<16x16xf32>
    %31 = math.exp %30 : vector<16x16xf32>
    %cst_17 = arith.constant dense<0.000000e+00> : vector<16xf32>
    %32 = vector.multi_reduction <add>, %31, %cst_17 [1] : vector<16x16xf32> to vector<16xf32>
    %33 = vector.shape_cast %32 : vector<16xf32> to vector<16x1xf32>
    %34 = tpu.reciprocal %33 {approx = true} : vector<16x1xf32> -> vector<16x1xf32>
    %35 = vector.broadcast %34 : vector<16x1xf32> to vector<16x16xf32>
    %36 = arith.mulf %31, %35 : vector<16x16xf32>
    %37 = arith.truncf %36 : vector<16x16xf32> to vector<16x16xbf16>
    %38 = arith.truncf %22 : vector<16x8xf32> to vector<16x8xbf16>
    %cst_18 = arith.constant dense<0.000000e+00> : vector<16x8xf32>
    %39 = tpu.matmul %37, %38, %cst_18 {dimension_numbers = #tpu.dot_dimension_numbers<[1], [0], [0], [1], [0, 0, 1, 1], [], []>} : vector<16x16xbf16>, vector<16x8xbf16>, vector<16x8xf32> -> vector<16x8xf32>
    %40 = vector.extract_strided_slice %18 {offsets = [0, 0], sizes = [8, 32], strides = [1, 1]} : vector<32x32xbf16> to vector<8x32xbf16>
    %41 = arith.truncf %39 : vector<16x8xf32> to vector<16x8xbf16>
    %cst_19 = arith.constant dense<0.000000e+00> : vector<16x32xf32>
    %42 = tpu.matmul %41, %40, %cst_19 {dimension_numbers = #tpu.dot_dimension_numbers<[1], [0], [0], [1], [0, 0, 1, 1], [], []>} : vector<16x8xbf16>, vector<8x32xbf16>, vector<16x32xf32> -> vector<16x32xf32>
    %43 = arith.addf %19, %42 : vector<16x32xf32>
    %44 = vector.extract_strided_slice %12 {offsets = [0, 8], sizes = [16, 8], strides = [1, 1]} : vector<16x32xf32> to vector<16x8xf32>
    %45 = vector.extract_strided_slice %13 {offsets = [0, 8], sizes = [16, 8], strides = [1, 1]} : vector<16x32xf32> to vector<16x8xf32>
    %46 = vector.extract_strided_slice %14 {offsets = [0, 8], sizes = [16, 8], strides = [1, 1]} : vector<16x32xf32> to vector<16x8xf32>
    %47 = arith.truncf %44 : vector<16x8xf32> to vector<16x8xbf16>
    %48 = arith.truncf %45 : vector<16x8xf32> to vector<16x8xbf16>
    %cst_20 = arith.constant dense<0.000000e+00> : vector<16x16xf32>
    %49 = tpu.matmul %47, %48, %cst_20 {dimension_numbers = #tpu.dot_dimension_numbers<[1], [1], [0], [0], [0, 0, 1, 0], [], []>} : vector<16x8xbf16>, vector<16x8xbf16>, vector<16x16xf32> -> vector<16x16xf32>
    %50 = arith.addf %49, %16 : vector<16x16xf32>
    %cst_21 = arith.constant dense<0xFF800000> : vector<16xf32>
    %51 = vector.multi_reduction <maximumf>, %50, %cst_21 [1] : vector<16x16xf32> to vector<16xf32>
    %52 = vector.shape_cast %51 : vector<16xf32> to vector<16x1xf32>
    %53 = vector.broadcast %52 : vector<16x1xf32> to vector<16x16xf32>
    %54 = arith.subf %50, %53 : vector<16x16xf32>
    %55 = math.exp %54 : vector<16x16xf32>
    %cst_22 = arith.constant dense<0.000000e+00> : vector<16xf32>
    %56 = vector.multi_reduction <add>, %55, %cst_22 [1] : vector<16x16xf32> to vector<16xf32>
    %57 = vector.shape_cast %56 : vector<16xf32> to vector<16x1xf32>
    %58 = tpu.reciprocal %57 {approx = true} : vector<16x1xf32> -> vector<16x1xf32>
    %59 = vector.broadcast %58 : vector<16x1xf32> to vector<16x16xf32>
    %60 = arith.mulf %55, %59 : vector<16x16xf32>
    %61 = arith.truncf %60 : vector<16x16xf32> to vector<16x16xbf16>
    %62 = arith.truncf %46 : vector<16x8xf32> to vector<16x8xbf16>
    %cst_23 = arith.constant dense<0.000000e+00> : vector<16x8xf32>
    %63 = tpu.matmul %61, %62, %cst_23 {dimension_numbers = #tpu.dot_dimension_numbers<[1], [0], [0], [1], [0, 0, 1, 1], [], []>} : vector<16x16xbf16>, vector<16x8xbf16>, vector<16x8xf32> -> vector<16x8xf32>
    %64 = vector.extract_strided_slice %18 {offsets = [8, 0], sizes = [8, 32], strides = [1, 1]} : vector<32x32xbf16> to vector<8x32xbf16>
    %65 = arith.truncf %63 : vector<16x8xf32> to vector<16x8xbf16>
    %cst_24 = arith.constant dense<0.000000e+00> : vector<16x32xf32>
    %66 = tpu.matmul %65, %64, %cst_24 {dimension_numbers = #tpu.dot_dimension_numbers<[1], [0], [0], [1], [0, 0, 1, 1], [], []>} : vector<16x8xbf16>, vector<8x32xbf16>, vector<16x32xf32> -> vector<16x32xf32>
    %67 = arith.addf %43, %66 : vector<16x32xf32>
    %68 = vector.extract_strided_slice %12 {offsets = [0, 16], sizes = [16, 8], strides = [1, 1]} : vector<16x32xf32> to vector<16x8xf32>
    %69 = vector.extract_strided_slice %13 {offsets = [0, 16], sizes = [16, 8], strides = [1, 1]} : vector<16x32xf32> to vector<16x8xf32>
    %70 = vector.extract_strided_slice %14 {offsets = [0, 16], sizes = [16, 8], strides = [1, 1]} : vector<16x32xf32> to vector<16x8xf32>
    %71 = arith.truncf %68 : vector<16x8xf32> to vector<16x8xbf16>
    %72 = arith.truncf %69 : vector<16x8xf32> to vector<16x8xbf16>
    %cst_25 = arith.constant dense<0.000000e+00> : vector<16x16xf32>
    %73 = tpu.matmul %71, %72, %cst_25 {dimension_numbers = #tpu.dot_dimension_numbers<[1], [1], [0], [0], [0, 0, 1, 0], [], []>} : vector<16x8xbf16>, vector<16x8xbf16>, vector<16x16xf32> -> vector<16x16xf32>
    %74 = arith.addf %73, %16 : vector<16x16xf32>
    %cst_26 = arith.constant dense<0xFF800000> : vector<16xf32>
    %75 = vector.multi_reduction <maximumf>, %74, %cst_26 [1] : vector<16x16xf32> to vector<16xf32>
    %76 = vector.shape_cast %75 : vector<16xf32> to vector<16x1xf32>
    %77 = vector.broadcast %76 : vector<16x1xf32> to vector<16x16xf32>
    %78 = arith.subf %74, %77 : vector<16x16xf32>
    %79 = math.exp %78 : vector<16x16xf32>
    %cst_27 = arith.constant dense<0.000000e+00> : vector<16xf32>
    %80 = vector.multi_reduction <add>, %79, %cst_27 [1] : vector<16x16xf32> to vector<16xf32>
    %81 = vector.shape_cast %80 : vector<16xf32> to vector<16x1xf32>
    %82 = tpu.reciprocal %81 {approx = true} : vector<16x1xf32> -> vector<16x1xf32>
    %83 = vector.broadcast %82 : vector<16x1xf32> to vector<16x16xf32>
    %84 = arith.mulf %79, %83 : vector<16x16xf32>
    %85 = arith.truncf %84 : vector<16x16xf32> to vector<16x16xbf16>
    %86 = arith.truncf %70 : vector<16x8xf32> to vector<16x8xbf16>
    %cst_28 = arith.constant dense<0.000000e+00> : vector<16x8xf32>
    %87 = tpu.matmul %85, %86, %cst_28 {dimension_numbers = #tpu.dot_dimension_numbers<[1], [0], [0], [1], [0, 0, 1, 1], [], []>} : vector<16x16xbf16>, vector<16x8xbf16>, vector<16x8xf32> -> vector<16x8xf32>
    %88 = vector.extract_strided_slice %18 {offsets = [16, 0], sizes = [8, 32], strides = [1, 1]} : vector<32x32xbf16> to vector<8x32xbf16>
    %89 = arith.truncf %87 : vector<16x8xf32> to vector<16x8xbf16>
    %cst_29 = arith.constant dense<0.000000e+00> : vector<16x32xf32>
    %90 = tpu.matmul %89, %88, %cst_29 {dimension_numbers = #tpu.dot_dimension_numbers<[1], [0], [0], [1], [0, 0, 1, 1], [], []>} : vector<16x8xbf16>, vector<8x32xbf16>, vector<16x32xf32> -> vector<16x32xf32>
    %91 = arith.addf %67, %90 : vector<16x32xf32>
    %92 = vector.extract_strided_slice %12 {offsets = [0, 24], sizes = [16, 8], strides = [1, 1]} : vector<16x32xf32> to vector<16x8xf32>
    %93 = vector.extract_strided_slice %13 {offsets = [0, 24], sizes = [16, 8], strides = [1, 1]} : vector<16x32xf32> to vector<16x8xf32>
    %94 = vector.extract_strided_slice %14 {offsets = [0, 24], sizes = [16, 8], strides = [1, 1]} : vector<16x32xf32> to vector<16x8xf32>
    %95 = arith.truncf %92 : vector<16x8xf32> to vector<16x8xbf16>
    %96 = arith.truncf %93 : vector<16x8xf32> to vector<16x8xbf16>
    %cst_30 = arith.constant dense<0.000000e+00> : vector<16x16xf32>
    %97 = tpu.matmul %95, %96, %cst_30 {dimension_numbers = #tpu.dot_dimension_numbers<[1], [1], [0], [0], [0, 0, 1, 0], [], []>} : vector<16x8xbf16>, vector<16x8xbf16>, vector<16x16xf32> -> vector<16x16xf32>
    %98 = arith.addf %97, %16 : vector<16x16xf32>
    %cst_31 = arith.constant dense<0xFF800000> : vector<16xf32>
    %99 = vector.multi_reduction <maximumf>, %98, %cst_31 [1] : vector<16x16xf32> to vector<16xf32>
    %100 = vector.shape_cast %99 : vector<16xf32> to vector<16x1xf32>
    %101 = vector.broadcast %100 : vector<16x1xf32> to vector<16x16xf32>
    %102 = arith.subf %98, %101 : vector<16x16xf32>
    %103 = math.exp %102 : vector<16x16xf32>
    %cst_32 = arith.constant dense<0.000000e+00> : vector<16xf32>
    %104 = vector.multi_reduction <add>, %103, %cst_32 [1] : vector<16x16xf32> to vector<16xf32>
    %105 = vector.shape_cast %104 : vector<16xf32> to vector<16x1xf32>
    %106 = tpu.reciprocal %105 {approx = true} : vector<16x1xf32> -> vector<16x1xf32>
    %107 = vector.broadcast %106 : vector<16x1xf32> to vector<16x16xf32>
    %108 = arith.mulf %103, %107 : vector<16x16xf32>
    %109 = arith.truncf %108 : vector<16x16xf32> to vector<16x16xbf16>
    %110 = arith.truncf %94 : vector<16x8xf32> to vector<16x8xbf16>
    %cst_33 = arith.constant dense<0.000000e+00> : vector<16x8xf32>
    %111 = tpu.matmul %109, %110, %cst_33 {dimension_numbers = #tpu.dot_dimension_numbers<[1], [0], [0], [1], [0, 0, 1, 1], [], []>} : vector<16x16xbf16>, vector<16x8xbf16>, vector<16x8xf32> -> vector<16x8xf32>
    %112 = vector.extract_strided_slice %18 {offsets = [24, 0], sizes = [8, 32], strides = [1, 1]} : vector<32x32xbf16> to vector<8x32xbf16>
    %113 = arith.truncf %111 : vector<16x8xf32> to vector<16x8xbf16>
    %cst_34 = arith.constant dense<0.000000e+00> : vector<16x32xf32>
    %114 = tpu.matmul %113, %112, %cst_34 {dimension_numbers = #tpu.dot_dimension_numbers<[1], [0], [0], [1], [0, 0, 1, 1], [], []>} : vector<16x8xbf16>, vector<8x32xbf16>, vector<16x32xf32> -> vector<16x32xf32>
    %115 = arith.addf %91, %114 : vector<16x32xf32>
    %c0_35 = arith.constant 0 : index
    %c0_36 = arith.constant 0 : index
    %c0_37 = arith.constant 0 : index
    %116 = vector.load %arg11[%c0_35, %c0_36, %c0_37] : memref<1x1x32xf32, #tpu.memory_space<vmem>>, vector<1x1x32xf32>
    %117 = vector.shape_cast %116 : vector<1x1x32xf32> to vector<1x32xf32>
    %118 = vector.broadcast %117 : vector<1x32xf32> to vector<16x32xf32>
    %119 = arith.addf %115, %118 : vector<16x32xf32>
    %120 = arith.addf %119, %3 : vector<16x32xf32>
    %c0_38 = arith.constant 0 : index
    %c0_39 = arith.constant 0 : index
    %c0_40 = arith.constant 0 : index
    %121 = vector.load %arg12[%c0_38, %c0_39, %c0_40] : memref<1x1x32xf32, #tpu.memory_space<vmem>>, vector<1x1x32xf32>
    %122 = vector.shape_cast %121 : vector<1x1x32xf32> to vector<1x32xf32>
    %c0_41 = arith.constant 0 : index
    %c0_42 = arith.constant 0 : index
    %c0_43 = arith.constant 0 : index
    %123 = vector.load %arg13[%c0_41, %c0_42, %c0_43] : memref<1x1x32xf32, #tpu.memory_space<vmem>>, vector<1x1x32xf32>
    %124 = vector.shape_cast %123 : vector<1x1x32xf32> to vector<1x32xf32>
    %cst_44 = arith.constant dense<0.000000e+00> : vector<16xf32>
    %125 = vector.multi_reduction <add>, %120, %cst_44 [1] : vector<16x32xf32> to vector<16xf32>
    %126 = vector.shape_cast %125 : vector<16xf32> to vector<16x1xf32>
    %cst_45 = arith.constant 3.200000e+01 : f32
    %127 = vector.broadcast %cst_45 : f32 to vector<16x1xf32>
    %128 = arith.divf %126, %127 : vector<16x1xf32>
    %129 = vector.broadcast %128 : vector<16x1xf32> to vector<16x32xf32>
    %130 = arith.subf %120, %129 : vector<16x32xf32>
    %131 = arith.mulf %130, %130 : vector<16x32xf32>
    %cst_46 = arith.constant dense<0.000000e+00> : vector<16xf32>
    %132 = vector.multi_reduction <add>, %131, %cst_46 [1] : vector<16x32xf32> to vector<16xf32>
    %133 = vector.shape_cast %132 : vector<16xf32> to vector<16x1xf32>
    %cst_47 = arith.constant 3.200000e+01 : f32
    %134 = vector.broadcast %cst_47 : f32 to vector<16x1xf32>
    %135 = arith.divf %133, %134 : vector<16x1xf32>
    %136 = vector.broadcast %128 : vector<16x1xf32> to vector<16x32xf32>
    %137 = arith.subf %120, %136 : vector<16x32xf32>
    %cst_48 = arith.constant 9.99999996E-13 : f32
    %138 = vector.broadcast %cst_48 : f32 to vector<16x1xf32>
    %139 = arith.addf %135, %138 : vector<16x1xf32>
    %140 = math.rsqrt %139 : vector<16x1xf32>
    %141 = vector.broadcast %140 : vector<16x1xf32> to vector<16x32xf32>
    %142 = arith.mulf %137, %141 : vector<16x32xf32>
    %143 = vector.broadcast %122 : vector<1x32xf32> to vector<16x32xf32>
    %144 = arith.mulf %142, %143 : vector<16x32xf32>
    %145 = vector.broadcast %124 : vector<1x32xf32> to vector<16x32xf32>
    %146 = arith.addf %144, %145 : vector<16x32xf32>
    %c0_49 = arith.constant 0 : index
    %c0_50 = arith.constant 0 : index
    %c0_51 = arith.constant 0 : index
    %147 = vector.load %arg14[%c0_49, %c0_50, %c0_51] : memref<1x32x64xbf16, #tpu.memory_space<vmem>>, vector<1x32x64xbf16>
    %148 = vector.shape_cast %147 : vector<1x32x64xbf16> to vector<32x64xbf16>
    %149 = arith.truncf %146 : vector<16x32xf32> to vector<16x32xbf16>
    %cst_52 = arith.constant dense<0.000000e+00> : vector<16x64xf32>
    %150 = tpu.matmul %149, %148, %cst_52 {dimension_numbers = #tpu.dot_dimension_numbers<[1], [0], [0], [1], [0, 0, 1, 1], [], []>} : vector<16x32xbf16>, vector<32x64xbf16>, vector<16x64xf32> -> vector<16x64xf32>
    %c0_53 = arith.constant 0 : index
    %c0_54 = arith.constant 0 : index
    %c0_55 = arith.constant 0 : index
    %151 = vector.load %arg15[%c0_53, %c0_54, %c0_55] : memref<1x1x64xf32, #tpu.memory_space<vmem>>, vector<1x1x64xf32>
    %152 = vector.shape_cast %151 : vector<1x1x64xf32> to vector<1x64xf32>
    %153 = vector.broadcast %152 : vector<1x64xf32> to vector<16x64xf32>
    %154 = arith.addf %150, %153 : vector<16x64xf32>
    %cst_56 = arith.constant 5.000000e-01 : f32
    %155 = vector.broadcast %cst_56 : f32 to vector<16x64xf32>
    %156 = arith.mulf %155, %154 : vector<16x64xf32>
    %cst_57 = arith.constant 4.471500e-02 : f32
    %157 = vector.broadcast %cst_57 : f32 to vector<16x64xf32>
    %158 = arith.mulf %157, %154 : vector<16x64xf32>
    %159 = arith.mulf %158, %154 : vector<16x64xf32>
    %160 = arith.mulf %159, %154 : vector<16x64xf32>
    %161 = arith.addf %154, %160 : vector<16x64xf32>
    %cst_58 = arith.constant 0.797884583 : f32
    %162 = vector.broadcast %cst_58 : f32 to vector<16x64xf32>
    %163 = arith.mulf %162, %161 : vector<16x64xf32>
    %164 = math.tanh %163 : vector<16x64xf32>
    %cst_59 = arith.constant 1.000000e+00 : f32
    %165 = vector.broadcast %cst_59 : f32 to vector<16x64xf32>
    %166 = arith.addf %165, %164 : vector<16x64xf32>
    %167 = arith.mulf %156, %166 : vector<16x64xf32>
    %c0_60 = arith.constant 0 : index
    %c0_61 = arith.constant 0 : index
    %c0_62 = arith.constant 0 : index
    %168 = vector.load %arg16[%c0_60, %c0_61, %c0_62] : memref<1x64x32xbf16, #tpu.memory_space<vmem>>, vector<1x64x32xbf16>
    %169 = vector.shape_cast %168 : vector<1x64x32xbf16> to vector<64x32xbf16>
    %170 = arith.truncf %167 : vector<16x64xf32> to vector<16x64xbf16>
    %cst_63 = arith.constant dense<0.000000e+00> : vector<16x32xf32>
    %171 = tpu.matmul %170, %169, %cst_63 {dimension_numbers = #tpu.dot_dimension_numbers<[1], [0], [0], [1], [0, 0, 1, 1], [], []>} : vector<16x64xbf16>, vector<64x32xbf16>, vector<16x32xf32> -> vector<16x32xf32>
    %c0_64 = arith.constant 0 : index
    %c0_65 = arith.constant 0 : index
    %c0_66 = arith.constant 0 : index
    %172 = vector.load %arg17[%c0_64, %c0_65, %c0_66] : memref<1x1x32xf32, #tpu.memory_space<vmem>>, vector<1x1x32xf32>
    %173 = vector.shape_cast %172 : vector<1x1x32xf32> to vector<1x32xf32>
    %174 = vector.broadcast %173 : vector<1x32xf32> to vector<16x32xf32>
    %175 = arith.addf %171, %174 : vector<16x32xf32>
    %176 = arith.addf %175, %146 : vector<16x32xf32>
    %c0_67 = arith.constant 0 : index
    %c0_68 = arith.constant 0 : index
    %c0_69 = arith.constant 0 : index
    %177 = vector.load %arg18[%c0_67, %c0_68, %c0_69] : memref<1x1x32xf32, #tpu.memory_space<vmem>>, vector<1x1x32xf32>
    %178 = vector.shape_cast %177 : vector<1x1x32xf32> to vector<1x32xf32>
    %c0_70 = arith.constant 0 : index
    %c0_71 = arith.constant 0 : index
    %c0_72 = arith.constant 0 : index
    %179 = vector.load %arg19[%c0_70, %c0_71, %c0_72] : memref<1x1x32xf32, #tpu.memory_space<vmem>>, vector<1x1x32xf32>
    %180 = vector.shape_cast %179 : vector<1x1x32xf32> to vector<1x32xf32>
    %cst_73 = arith.constant dense<0.000000e+00> : vector<16xf32>
    %181 = vector.multi_reduction <add>, %176, %cst_73 [1] : vector<16x32xf32> to vector<16xf32>
    %182 = vector.shape_cast %181 : vector<16xf32> to vector<16x1xf32>
    %cst_74 = arith.constant 3.200000e+01 : f32
    %183 = vector.broadcast %cst_74 : f32 to vector<16x1xf32>
    %184 = arith.divf %182, %183 : vector<16x1xf32>
    %185 = vector.broadcast %184 : vector<16x1xf32> to vector<16x32xf32>
    %186 = arith.subf %176, %185 : vector<16x32xf32>
    %187 = arith.mulf %186, %186 : vector<16x32xf32>
    %cst_75 = arith.constant dense<0.000000e+00> : vector<16xf32>
    %188 = vector.multi_reduction <add>, %187, %cst_75 [1] : vector<16x32xf32> to vector<16xf32>
    %189 = vector.shape_cast %188 : vector<16xf32> to vector<16x1xf32>
    %cst_76 = arith.constant 3.200000e+01 : f32
    %190 = vector.broadcast %cst_76 : f32 to vector<16x1xf32>
    %191 = arith.divf %189, %190 : vector<16x1xf32>
    %192 = vector.broadcast %184 : vector<16x1xf32> to vector<16x32xf32>
    %193 = arith.subf %176, %192 : vector<16x32xf32>
    %cst_77 = arith.constant 9.99999996E-13 : f32
    %194 = vector.broadcast %cst_77 : f32 to vector<16x1xf32>
    %195 = arith.addf %191, %194 : vector<16x1xf32>
    %196 = math.rsqrt %195 : vector<16x1xf32>
    %197 = vector.broadcast %196 : vector<16x1xf32> to vector<16x32xf32>
    %198 = arith.mulf %193, %197 : vector<16x32xf32>
    %199 = vector.broadcast %178 : vector<1x32xf32> to vector<16x32xf32>
    %200 = arith.mulf %198, %199 : vector<16x32xf32>
    %201 = vector.broadcast %180 : vector<1x32xf32> to vector<16x32xf32>
    %202 = arith.addf %200, %201 : vector<16x32xf32>
    %c0_78 = arith.constant 0 : index
    %c0_79 = arith.constant 0 : index
    %203 = vector.load %arg20[%c0_78, %c0_79] : memref<16x32xf32, #tpu.memory_space<vmem>>, vector<16x32xf32>
    tpu.vector_store %arg20[%c0_78, %c0_79], %202 {strides = array<i32>} : memref<16x32xf32, #tpu.memory_space<vmem>>, vector<16x32xf32>,
    return
  }
  func.func @transform_0(%arg0: i32, %arg1: i32) -> (i32, i32) {
    %c0_i32 = arith.constant 0 : i32
    %c0_i32_0 = arith.constant 0 : i32
    return %arg0, %c0_i32 : i32, i32
  }
  func.func @transform_1(%arg0: i32, %arg1: i32) -> (i32, i32, i32) {
    %c0_i32 = arith.constant 0 : i32
    %c0_i32_0 = arith.constant 0 : i32
    %c0_i32_1 = arith.constant 0 : i32
    return %arg0, %c0_i32, %c0_i32_0 : i32, i32, i32
  }
  func.func @transform_2(%arg0: i32, %arg1: i32) -> (i32, i32) {
    %c0_i32 = arith.constant 0 : i32
    %c0_i32_0 = arith.constant 0 : i32
    %c0_i32_1 = arith.constant 0 : i32
    return %c0_i32, %c0_i32_0 : i32, i32
  }
  func.func @transform_3(%arg0: i32, %arg1: i32) -> (i32, i32) {
    %c0_i32 = arith.constant 0 : i32
    %c0_i32_0 = arith.constant 0 : i32
    %c0_i32_1 = arith.constant 0 : i32
    return %c0_i32, %c0_i32_0 : i32, i32
  }
  func.func @transform_4(%arg0: i32, %arg1: i32) -> (i32, i32) {
    %c0_i32 = arith.constant 0 : i32
    %c0_i32_0 = arith.constant 0 : i32
    %c0_i32_1 = arith.constant 0 : i32
    return %c0_i32, %c0_i32_0 : i32, i32
  }
  func.func @transform_5(%arg0: i32, %arg1: i32) -> (i32, i32) {
    %c0_i32 = arith.constant 0 : i32
    %c0_i32_0 = arith.constant 0 : i32
    %c0_i32_1 = arith.constant 0 : i32
    return %c0_i32, %c0_i32_0 : i32, i32
  }
  func.func @transform_6(%arg0: i32, %arg1: i32) -> (i32, i32, i32) {
    %c0_i32 = arith.constant 0 : i32
    %c0_i32_0 = arith.constant 0 : i32
    %c0_i32_1 = arith.constant 0 : i32
    return %arg1, %c0_i32, %c0_i32_0 : i32, i32, i32
  }
  func.func @transform_7(%arg0: i32, %arg1: i32) -> (i32, i32, i32) {
    %c0_i32 = arith.constant 0 : i32
    %c0_i32_0 = arith.constant 0 : i32
    %c0_i32_1 = arith.constant 0 : i32
    return %arg1, %c0_i32, %c0_i32_0 : i32, i32, i32
  }
  func.func @transform_8(%arg0: i32, %arg1: i32) -> (i32, i32, i32) {
    %c0_i32 = arith.constant 0 : i32
    %c0_i32_0 = arith.constant 0 : i32
    %c0_i32_1 = arith.constant 0 : i32
    return %arg1, %c0_i32, %c0_i32_0 : i32, i32, i32
  }
  func.func @transform_9(%arg0: i32, %arg1: i32) -> (i32, i32, i32) {
    %c0_i32 = arith.constant 0 : i32
    %c0_i32_0 = arith.constant 0 : i32
    %c0_i32_1 = arith.constant 0 : i32
    return %arg1, %c0_i32, %c0_i32_0 : i32, i32, i32
  }
  func.func @transform_10(%arg0: i32, %arg1: i32) -> (i32, i32, i32) {
    %c0_i32 = arith.constant 0 : i32
    %c0_i32_0 = arith.constant 0 : i32
    %c0_i32_1 = arith.constant 0 : i32
    return %arg1, %c0_i32, %c0_i32_0 : i32, i32, i32
  }
  func.func @transform_11(%arg0: i32, %arg1: i32) -> (i32, i32, i32) {
    %c0_i32 = arith.constant 0 : i32
    %c0_i32_0 = arith.constant 0 : i32
    %c0_i32_1 = arith.constant 0 : i32
    return %arg1, %c0_i32, %c0_i32_0 : i32, i32, i32
  }
  func.func @transform_12(%arg0: i32, %arg1: i32) -> (i32, i32, i32) {
    %c0_i32 = arith.constant 0 : i32
    %c0_i32_0 = arith.constant 0 : i32
    %c0_i32_1 = arith.constant 0 : i32
    return %arg1, %c0_i32, %c0_i32_0 : i32, i32, i32
  }
  func.func @transform_13(%arg0: i32, %arg1: i32) -> (i32, i32, i32) {
    %c0_i32 = arith.constant 0 : i32
    %c0_i32_0 = arith.constant 0 : i32
    %c0_i32_1 = arith.constant 0 : i32
    return %arg1, %c0_i32, %c0_i32_0 : i32, i32, i32
  }
  func.func @transform_14(%arg0: i32, %arg1: i32) -> (i32, i32, i32) {
    %c0_i32 = arith.constant 0 : i32
    %c0_i32_0 = arith.constant 0 : i32
    %c0_i32_1 = arith.constant 0 : i32
    return %arg1, %c0_i32, %c0_i32_0 : i32, i32, i32
  }
  func.func @transform_15(%arg0: i32, %arg1: i32) -> (i32, i32, i32) {
    %c0_i32 = arith.constant 0 : i32
    %c0_i32_0 = arith.constant 0 : i32
    %c0_i32_1 = arith.constant 0 : i32
    return %arg1, %c0_i32, %c0_i32_0 : i32, i32, i32
  }
  func.func @transform_16(%arg0: i32, %arg1: i32) -> (i32, i32, i32) {
    %c0_i32 = arith.constant 0 : i32
    %c0_i32_0 = arith.constant 0 : i32
    %c0_i32_1 = arith.constant 0 : i32
    return %arg1, %c0_i32, %c0_i32_0 : i32, i32, i32
  }
  func.func @transform_17(%arg0: i32, %arg1: i32) -> (i32, i32, i32) {
    %c0_i32 = arith.constant 0 : i32
    %c0_i32_0 = arith.constant 0 : i32
    %c0_i32_1 = arith.constant 0 : i32
    return %arg1, %c0_i32, %c0_i32_0 : i32, i32, i32
  }
  func.func @transform_18(%arg0: i32, %arg1: i32) -> (i32, i32) {
    %c0_i32 = arith.constant 0 : i32
    %c0_i32_0 = arith.constant 0 : i32
    return %arg0, %c0_i32 : i32, i32
  }
}

</mosaic_0001>

<llo_original>
// kernel: albert_unshared_forward.1
$region0: #{albert_unshared_forward.1}
  #allocation0 [shape = 'u32[]', space=smem, size = 0x4, offset = 0x4, fixed_abs, tag = 'smem constant byte address 0x4 - core index']
  #allocation1 [shape = 'u32[144,128]{1,0:T(1,128)}', space=vmem, size = 0x12000, scoped, tag = 'internal scratch']
  %s0 = inlined_call_operand.vmem [shape: f32[16,16], index: 0, kind: input, shape index: {}]
  %s1 = inlined_call_operand.vmem [shape: f32[1,16,16], index: 1, kind: input, shape index: {}]
  %s2 = inlined_call_operand.vmem [shape: f32[1,16], index: 2, kind: input, shape index: {}]
  %s3 = inlined_call_operand.vmem [shape: f32[1,16], index: 3, kind: input, shape index: {}]
  %s4 = inlined_call_operand.vmem [shape: bf16[16,32], index: 4, kind: input, shape index: {}]
  %s5 = inlined_call_operand.vmem [shape: f32[1,32], index: 5, kind: input, shape index: {}]
  %s6 = inlined_call_operand.vmem [shape: bf16[2,32,96], index: 6, kind: input, shape index: {}]
  %s7 = inlined_call_operand.vmem [shape: f32[2,1,96], index: 7, kind: input, shape index: {}]
  %s8 = inlined_call_operand.vmem [shape: bf16[2,32,32], index: 8, kind: input, shape index: {}]
  %s9 = inlined_call_operand.vmem [shape: f32[2,1,32], index: 9, kind: input, shape index: {}]
  %s10 = inlined_call_operand.vmem [shape: f32[2,1,32], index: 10, kind: input, shape index: {}]
  %s11 = inlined_call_operand.vmem [shape: f32[2,1,32], index: 11, kind: input, shape index: {}]
  %s12 = inlined_call_operand.vmem [shape: bf16[2,32,64], index: 12, kind: input, shape index: {}]
  %s13 = inlined_call_operand.vmem [shape: f32[2,1,64], index: 13, kind: input, shape index: {}]
  %s14 = inlined_call_operand.vmem [shape: bf16[2,64,32], index: 14, kind: input, shape index: {}]
  %s15 = inlined_call_operand.vmem [shape: f32[2,1,32], index: 15, kind: input, shape index: {}]
  %s16 = inlined_call_operand.vmem [shape: f32[2,1,32], index: 16, kind: input, shape index: {}]
  %s17 = inlined_call_operand.vmem [shape: f32[2,1,32], index: 17, kind: input, shape index: {}]
  %s18 = inlined_call_operand.hbm [shape: f32[16,32], index: 18, kind: output, shape index: {}]
  %s19 = sld [smem:[#allocation0]]
  $region109: #{albert_unshared_forward.1} parent=0
    _
  %s21 = ssub.s32 1, %s19
  %s22 = scalar_select 0, %s21, %s19
  $region1: #{albert_unshared_forward.1} parent=0
    #allocation2 [shape = 'u8[8192]{0}', space=vmem, size = 0x2000, scoped, tag = 'output window, operand 0, single buffered']
    #allocation3 [shape = 's32[2]{0}', space=sflag, size = 0x8, scoped, tag = 'scoped memory for albert_unshared_forward.1']
    %23 = vsyncpa [#allocation3], 0
    loop: start=0, step=1, limit=4
    $region2: #{albert_unshared_forward.1} parent=1 // loop_pre_header
      _
    $region3: #{albert_unshared_forward.1} parent=1 // loop_header
      %s25 = sphi 0, %s29
      %p26 = scmp.ge.s32.totalorder %s25, 4
      %s32 = sphi 0, %s44
      %s33 = sphi 0, %s40
      %s34 = sphi 0, %s32
      %s35 = sphi 0, %s33
      %s36 = sphi 0, %s34
      %s37 = sphi 0, %s35
      %s47 = sphi 0, %s49
      %s50 = sphi 0, %s47
      %s51 = sphi 0, %s50
      %s67 = sphi 0, %s51
      %s73 = sphi 0, %s75
      %s76 = sphi 0, %s73
      %s77 = sphi 0, %s76
      %s93 = sphi 0, %s77
      %s97 = sphi 0, %s97
      %s99 = sphi 0, %s97
      %s100 = sphi 0, %s99
      %s114 = sphi 0, %s100
      %s118 = sphi 0, %s118
      %s120 = sphi 0, %s118
      %s121 = sphi 0, %s120
      %s135 = sphi 0, %s121
      %s139 = sphi 0, %s139
      %s141 = sphi 0, %s139
      %s142 = sphi 0, %s141
      %s156 = sphi 0, %s142
      %s160 = sphi 0, %s160
      %s162 = sphi 0, %s160
      %s163 = sphi 0, %s162
      %s177 = sphi 0, %s163
      %s183 = sphi 0, %s185
      %s186 = sphi 0, %s183
      %s187 = sphi 0, %s186
      %s203 = sphi 0, %s187
      %s209 = sphi 0, %s211
      %s212 = sphi 0, %s209
      %s213 = sphi 0, %s212
      %s229 = sphi 0, %s213
      %s235 = sphi 0, %s237
      %s238 = sphi 0, %s235
      %s239 = sphi 0, %s238
      %s255 = sphi 0, %s239
      %s261 = sphi 0, %s263
      %s264 = sphi 0, %s261
      %s265 = sphi 0, %s264
      %s281 = sphi 0, %s265
      %s287 = sphi 0, %s289
      %s290 = sphi 0, %s287
      %s291 = sphi 0, %s290
      %s307 = sphi 0, %s291
      %s313 = sphi 0, %s315
      %s316 = sphi 0, %s313
      %s317 = sphi 0, %s316
      %s333 = sphi 0, %s317
      %s339 = sphi 0, %s341
      %s342 = sphi 0, %s339
      %s343 = sphi 0, %s342
      %s359 = sphi 0, %s343
      %s365 = sphi 0, %s367
      %s368 = sphi 0, %s365
      %s369 = sphi 0, %s368
      %s385 = sphi 0, %s369
      %s391 = sphi 0, %s393
      %s394 = sphi 0, %s391
      %s395 = sphi 0, %s394
      %s411 = sphi 0, %s395
      %s417 = sphi 0, %s419
      %s420 = sphi 0, %s417
      %s421 = sphi 0, %s420
      %s437 = sphi 0, %s421
      %s443 = sphi 0, %s445
      %s446 = sphi 0, %s443
      %s447 = sphi 0, %s446
      %s463 = sphi 0, %s447
      %s469 = sphi 0, %s471
      %s472 = sphi 0, %s469
      %s473 = sphi 0, %s472
      %s489 = sphi 0, %s473
      %s495 = sphi 0, %s497
      %s498 = sphi 0, %s495
      %s499 = sphi 0, %s498
      %s515 = sphi 0, %s499
    $region4: #{albert_unshared_forward.1} parent=1 // loop_header_branch
      %28 = sbr.rel (%p26) target = $region8
    $region5: #{albert_unshared_forward.1} parent=1 // loop_body
      %s30 = ssub.s32 %s25, 1
      %s31 = ssub.s32 %s25, 2
      %s38 = sadd.s32 1, %s33
      %p39 = scmp.ge.s32.totalorder %s38, 2
      %s40 = scalar_select %p39, 0, %s38
      %s41 = sadd.s32 1, %s32
      %s42 = scalar_select %p39, %s41, %s32
      %p43 = scmp.ge.s32.totalorder %s42, 1
      %s44 = scalar_select %p43, 0, %s42
      %s45 = ssub.s32 %s32, %s44
      %p46 = scmp.eq.s32.totalorder %s45, 0
      %s48 = sadd.s32 %s47, 1
      %s49 = scalar_select %p46, %s47, %s48
      %p52 = pneg %p46
      %p53 = scmp.eq.s32.totalorder %s25, 1
      %p54 = por %p52, %p53
      %p55 = scmp.ne.s32.totalorder %s47, %s50
      %p56 = scmp.eq.s32.totalorder %s25, 0
      %p57 = por %p55, %p56
      %p58 = scmp.ne.s32.totalorder %s47, %s50
      %p59 = scmp.eq.s32.totalorder %s30, 1
      %p60 = por %p58, %p59
      %p61 = scmp.ne.s32.totalorder %s50, %s51
      %p62 = scmp.eq.s32.totalorder %s30, 0
      %p63 = por %p61, %p62
      %p64 = scmp.ne.s32.totalorder %s50, %s51
      %p65 = scmp.eq.s32.totalorder %s31, 1
      %p66 = por %p64, %p65
      %p68 = scmp.ne.s32.totalorder %s51, %s67
      %p69 = scmp.eq.s32.totalorder %s31, 0
      %p70 = por %p68, %p69
      %s71 = ssub.s32 %s32, %s44
      %p72 = scmp.eq.s32.totalorder %s71, 0
      %s74 = sadd.s32 %s73, 1
      %s75 = scalar_select %p72, %s73, %s74
      %p78 = pneg %p72
      %p79 = scmp.eq.s32.totalorder %s25, 1
      %p80 = por %p78, %p79
      %p81 = scmp.ne.s32.totalorder %s73, %s76
      %p82 = scmp.eq.s32.totalorder %s25, 0
      %p83 = por %p81, %p82
      %p84 = scmp.ne.s32.totalorder %s73, %s76
      %p85 = scmp.eq.s32.totalorder %s30, 1
      %p86 = por %p84, %p85
      %p87 = scmp.ne.s32.totalorder %s76, %s77
      %p88 = scmp.eq.s32.totalorder %s30, 0
      %p89 = por %p87, %p88
      %p90 = scmp.ne.s32.totalorder %s76, %s77
      %p91 = scmp.eq.s32.totalorder %s31, 1
      %p92 = por %p90, %p91
      %p94 = scmp.ne.s32.totalorder %s77, %s93
      %p95 = scmp.eq.s32.totalorder %s31, 0
      %p96 = por %p94, %p95
      %s98 = sadd.s32 %s97, 1
      %p101 = scmp.eq.s32.totalorder %s25, 1
      %p102 = scmp.ne.s32.totalorder %s97, %s99
      %p103 = scmp.eq.s32.totalorder %s25, 0
      %p104 = por %p102, %p103
      %p105 = scmp.ne.s32.totalorder %s97, %s99
      %p106 = scmp.eq.s32.totalorder %s30, 1
      %p107 = por %p105, %p106
      %p108 = scmp.ne.s32.totalorder %s99, %s100
      %p109 = scmp.eq.s32.totalorder %s30, 0
      %p110 = por %p108, %p109
      %p111 = scmp.ne.s32.totalorder %s99, %s100
      %p112 = scmp.eq.s32.totalorder %s31, 1
      %p113 = por %p111, %p112
      %p115 = scmp.ne.s32.totalorder %s100, %s114
      %p116 = scmp.eq.s32.totalorder %s31, 0
      %p117 = por %p115, %p116
      %s119 = sadd.s32 %s118, 1
      %p122 = scmp.eq.s32.totalorder %s25, 1
      %p123 = scmp.ne.s32.totalorder %s118, %s120
      %p124 = scmp.eq.s32.totalorder %s25, 0
      %p125 = por %p123, %p124
      %p126 = scmp.ne.s32.totalorder %s118, %s120
      %p127 = scmp.eq.s32.totalorder %s30, 1
      %p128 = por %p126, %p127
      %p129 = scmp.ne.s32.totalorder %s120, %s121
      %p130 = scmp.eq.s32.totalorder %s30, 0
      %p131 = por %p129, %p130
      %p132 = scmp.ne.s32.totalorder %s120, %s121
      %p133 = scmp.eq.s32.totalorder %s31, 1
      %p134 = por %p132, %p133
      %p136 = scmp.ne.s32.totalorder %s121, %s135
      %p137 = scmp.eq.s32.totalorder %s31, 0
      %p138 = por %p136, %p137
      %s140 = sadd.s32 %s139, 1
      %p143 = scmp.eq.s32.totalorder %s25, 1
      %p144 = scmp.ne.s32.totalorder %s139, %s141
      %p145 = scmp.eq.s32.totalorder %s25, 0
      %p146 = por %p144, %p145
      %p147 = scmp.ne.s32.totalorder %s139, %s141
      %p148 = scmp.eq.s32.totalorder %s30, 1
      %p149 = por %p147, %p148
      %p150 = scmp.ne.s32.totalorder %s141, %s142
      %p151 = scmp.eq.s32.totalorder %s30, 0
      %p152 = por %p150, %p151
      %p153 = scmp.ne.s32.totalorder %s141, %s142
      %p154 = scmp.eq.s32.totalorder %s31, 1
      %p155 = por %p153, %p154
      %p157 = scmp.ne.s32.totalorder %s142, %s156
      %p158 = scmp.eq.s32.totalorder %s31, 0
      %p159 = por %p157, %p158
      %s161 = sadd.s32 %s160, 1
      %p164 = scmp.eq.s32.totalorder %s25, 1
      %p165 = scmp.ne.s32.totalorder %s160, %s162
      %p166 = scmp.eq.s32.totalorder %s25, 0
      %p167 = por %p165, %p166
      %p168 = scmp.ne.s32.totalorder %s160, %s162
      %p169 = scmp.eq.s32.totalorder %s30, 1
      %p170 = por %p168, %p169
      %p171 = scmp.ne.s32.totalorder %s162, %s163
      %p172 = scmp.eq.s32.totalorder %s30, 0
      %p173 = por %p171, %p172
      %p174 = scmp.ne.s32.totalorder %s162, %s163
      %p175 = scmp.eq.s32.totalorder %s31, 1
      %p176 = por %p174, %p175
      %p178 = scmp.ne.s32.totalorder %s163, %s177
      %p179 = scmp.eq.s32.totalorder %s31, 0
      %p180 = por %p178, %p179
      %s181 = ssub.s32 %s33, %s40
      %p182 = scmp.eq.s32.totalorder %s181, 0
      %s184 = sadd.s32 %s183, 1
      %s185 = scalar_select %p182, %s183, %s184
      %p188 = pneg %p182
      %p189 = scmp.eq.s32.totalorder %s25, 1
      %p190 = por %p188, %p189
      %p191 = scmp.ne.s32.totalorder %s183, %s186
      %p192 = scmp.eq.s32.totalorder %s25, 0
      %p193 = por %p191, %p192
      %p194 = scmp.ne.s32.totalorder %s183, %s186
      %p195 = scmp.eq.s32.totalorder %s30, 1
      %p196 = por %p194, %p195
      %p197 = scmp.ne.s32.totalorder %s186, %s187
      %p198 = scmp.eq.s32.totalorder %s30, 0
      %p199 = por %p197, %p198
      %p200 = scmp.ne.s32.totalorder %s186, %s187
      %p201 = scmp.eq.s32.totalorder %s31, 1
      %p202 = por %p200, %p201
      %p204 = scmp.ne.s32.totalorder %s187, %s203
      %p205 = scmp.eq.s32.totalorder %s31, 0
      %p206 = por %p204, %p205
      %s207 = ssub.s32 %s33, %s40
      %p208 = scmp.eq.s32.totalorder %s207, 0
      %s210 = sadd.s32 %s209, 1
      %s211 = scalar_select %p208, %s209, %s210
      %p214 = pneg %p208
      %p215 = scmp.eq.s32.totalorder %s25, 1
      %p216 = por %p214, %p215
      %p217 = scmp.ne.s32.totalorder %s209, %s212
      %p218 = scmp.eq.s32.totalorder %s25, 0
      %p219 = por %p217, %p218
      %p220 = scmp.ne.s32.totalorder %s209, %s212
      %p221 = scmp.eq.s32.totalorder %s30, 1
      %p222 = por %p220, %p221
      %p223 = scmp.ne.s32.totalorder %s212, %s213
      %p224 = scmp.eq.s32.totalorder %s30, 0
      %p225 = por %p223, %p224
      %p226 = scmp.ne.s32.totalorder %s212, %s213
      %p227 = scmp.eq.s32.totalorder %s31, 1
      %p228 = por %p226, %p227
      %p230 = scmp.ne.s32.totalorder %s213, %s229
      %p231 = scmp.eq.s32.totalorder %s31, 0
      %p232 = por %p230, %p231
      %s233 = ssub.s32 %s33, %s40
      %p234 = scmp.eq.s32.totalorder %s233, 0
      %s236 = sadd.s32 %s235, 1
      %s237 = scalar_select %p234, %s235, %s236
      %p240 = pneg %p234
      %p241 = scmp.eq.s32.totalorder %s25, 1
      %p242 = por %p240, %p241
      %p243 = scmp.ne.s32.totalorder %s235, %s238
      %p244 = scmp.eq.s32.totalorder %s25, 0
      %p245 = por %p243, %p244
      %p246 = scmp.ne.s32.totalorder %s235, %s238
      %p247 = scmp.eq.s32.totalorder %s30, 1
      %p248 = por %p246, %p247
      %p249 = scmp.ne.s32.totalorder %s238, %s239
      %p250 = scmp.eq.s32.totalorder %s30, 0
      %p251 = por %p249, %p250
      %p252 = scmp.ne.s32.totalorder %s238, %s239
      %p253 = scmp.eq.s32.totalorder %s31, 1
      %p254 = por %p252, %p253
      %p256 = scmp.ne.s32.totalorder %s239, %s255
      %p257 = scmp.eq.s32.totalorder %s31, 0
      %p258 = por %p256, %p257
      %s259 = ssub.s32 %s33, %s40
      %p260 = scmp.eq.s32.totalorder %s259, 0
      %s262 = sadd.s32 %s261, 1
      %s263 = scalar_select %p260, %s261, %s262
      %p266 = pneg %p260
      %p267 = scmp.eq.s32.totalorder %s25, 1
      %p268 = por %p266, %p267
      %p269 = scmp.ne.s32.totalorder %s261, %s264
      %p270 = scmp.eq.s32.totalorder %s25, 0
      %p271 = por %p269, %p270
      %p272 = scmp.ne.s32.totalorder %s261, %s264
      %p273 = scmp.eq.s32.totalorder %s30, 1
      %p274 = por %p272, %p273
      %p275 = scmp.ne.s32.totalorder %s264, %s265
      %p276 = scmp.eq.s32.totalorder %s30, 0
      %p277 = por %p275, %p276
      %p278 = scmp.ne.s32.totalorder %s264, %s265
      %p279 = scmp.eq.s32.totalorder %s31, 1
      %p280 = por %p278, %p279
      %p282 = scmp.ne.s32.totalorder %s265, %s281
      %p283 = scmp.eq.s32.totalorder %s31, 0
      %p284 = por %p282, %p283
      %s285 = ssub.s32 %s33, %s40
      %p286 = scmp.eq.s32.totalorder %s285, 0
      %s288 = sadd.s32 %s287, 1
      %s289 = scalar_select %p286, %s287, %s288
      %p292 = pneg %p286
      %p293 = scmp.eq.s32.totalorder %s25, 1
      %p294 = por %p292, %p293
      %p295 = scmp.ne.s32.totalorder %s287, %s290
      %p296 = scmp.eq.s32.totalorder %s25, 0
      %p297 = por %p295, %p296
      %p298 = scmp.ne.s32.totalorder %s287, %s290
      %p299 = scmp.eq.s32.totalorder %s30, 1
      %p300 = por %p298, %p299
      %p301 = scmp.ne.s32.totalorder %s290, %s291
      %p302 = scmp.eq.s32.totalorder %s30, 0
      %p303 = por %p301, %p302
      %p304 = scmp.ne.s32.totalorder %s290, %s291
      %p305 = scmp.eq.s32.totalorder %s31, 1
      %p306 = por %p304, %p305
      %p308 = scmp.ne.s32.totalorder %s291, %s307
      %p309 = scmp.eq.s32.totalorder %s31, 0
      %p310 = por %p308, %p309
      %s311 = ssub.s32 %s33, %s40
      %p312 = scmp.eq.s32.totalorder %s311, 0
      %s314 = sadd.s32 %s313, 1
      %s315 = scalar_select %p312, %s313, %s314
      %p318 = pneg %p312
      %p319 = scmp.eq.s32.totalorder %s25, 1
      %p320 = por %p318, %p319
      %p321 = scmp.ne.s32.totalorder %s313, %s316
      %p322 = scmp.eq.s32.totalorder %s25, 0
      %p323 = por %p321, %p322
      %p324 = scmp.ne.s32.totalorder %s313, %s316
      %p325 = scmp.eq.s32.totalorder %s30, 1
      %p326 = por %p324, %p325
      %p327 = scmp.ne.s32.totalorder %s316, %s317
      %p328 = scmp.eq.s32.totalorder %s30, 0
      %p329 = por %p327, %p328
      %p330 = scmp.ne.s32.totalorder %s316, %s317
      %p331 = scmp.eq.s32.totalorder %s31, 1
      %p332 = por %p330, %p331
      %p334 = scmp.ne.s32.totalorder %s317, %s333
      %p335 = scmp.eq.s32.totalorder %s31, 0
      %p336 = por %p334, %p335
      %s337 = ssub.s32 %s33, %s40
      %p338 = scmp.eq.s32.totalorder %s337, 0
      %s340 = sadd.s32 %s339, 1
      %s341 = scalar_select %p338, %s339, %s340
      %p344 = pneg %p338
      %p345 = scmp.eq.s32.totalorder %s25, 1
      %p346 = por %p344, %p345
      %p347 = scmp.ne.s32.totalorder %s339, %s342
      %p348 = scmp.eq.s32.totalorder %s25, 0
      %p349 = por %p347, %p348
      %p350 = scmp.ne.s32.totalorder %s339, %s342
      %p351 = scmp.eq.s32.totalorder %s30, 1
      %p352 = por %p350, %p351
      %p353 = scmp.ne.s32.totalorder %s342, %s343
      %p354 = scmp.eq.s32.totalorder %s30, 0
      %p355 = por %p353, %p354
      %p356 = scmp.ne.s32.totalorder %s342, %s343
      %p357 = scmp.eq.s32.totalorder %s31, 1
      %p358 = por %p356, %p357
      %p360 = scmp.ne.s32.totalorder %s343, %s359
      %p361 = scmp.eq.s32.totalorder %s31, 0
      %p362 = por %p360, %p361
      %s363 = ssub.s32 %s33, %s40
      %p364 = scmp.eq.s32.totalorder %s363, 0
      %s366 = sadd.s32 %s365, 1
      %s367 = scalar_select %p364, %s365, %s366
      %p370 = pneg %p364
      %p371 = scmp.eq.s32.totalorder %s25, 1
      %p372 = por %p370, %p371
      %p373 = scmp.ne.s32.totalorder %s365, %s368
      %p374 = scmp.eq.s32.totalorder %s25, 0
      %p375 = por %p373, %p374
      %p376 = scmp.ne.s32.totalorder %s365, %s368
      %p377 = scmp.eq.s32.totalorder %s30, 1
      %p378 = por %p376, %p377
      %p379 = scmp.ne.s32.totalorder %s368, %s369
      %p380 = scmp.eq.s32.totalorder %s30, 0
      %p381 = por %p379, %p380
      %p382 = scmp.ne.s32.totalorder %s368, %s369
      %p383 = scmp.eq.s32.totalorder %s31, 1
      %p384 = por %p382, %p383
      %p386 = scmp.ne.s32.totalorder %s369, %s385
      %p387 = scmp.eq.s32.totalorder %s31, 0
      %p388 = por %p386, %p387
      %s389 = ssub.s32 %s33, %s40
      %p390 = scmp.eq.s32.totalorder %s389, 0
      %s392 = sadd.s32 %s391, 1
      %s393 = scalar_select %p390, %s391, %s392
      %p396 = pneg %p390
      %p397 = scmp.eq.s32.totalorder %s25, 1
      %p398 = por %p396, %p397
      %p399 = scmp.ne.s32.totalorder %s391, %s394
      %p400 = scmp.eq.s32.totalorder %s25, 0
      %p401 = por %p399, %p400
      %p402 = scmp.ne.s32.totalorder %s391, %s394
      %p403 = scmp.eq.s32.totalorder %s30, 1
      %p404 = por %p402, %p403
      %p405 = scmp.ne.s32.totalorder %s394, %s395
      %p406 = scmp.eq.s32.totalorder %s30, 0
      %p407 = por %p405, %p406
      %p408 = scmp.ne.s32.totalorder %s394, %s395
      %p409 = scmp.eq.s32.totalorder %s31, 1
      %p410 = por %p408, %p409
      %p412 = scmp.ne.s32.totalorder %s395, %s411
      %p413 = scmp.eq.s32.totalorder %s31, 0
      %p414 = por %p412, %p413
      %s415 = ssub.s32 %s33, %s40
      %p416 = scmp.eq.s32.totalorder %s415, 0
      %s418 = sadd.s32 %s417, 1
      %s419 = scalar_select %p416, %s417, %s418
      %p422 = pneg %p416
      %p423 = scmp.eq.s32.totalorder %s25, 1
      %p424 = por %p422, %p423
      %p425 = scmp.ne.s32.totalorder %s417, %s420
      %p426 = scmp.eq.s32.totalorder %s25, 0
      %p427 = por %p425, %p426
      %p428 = scmp.ne.s32.totalorder %s417, %s420
      %p429 = scmp.eq.s32.totalorder %s30, 1
      %p430 = por %p428, %p429
      %p431 = scmp.ne.s32.totalorder %s420, %s421
      %p432 = scmp.eq.s32.totalorder %s30, 0
      %p433 = por %p431, %p432
      %p434 = scmp.ne.s32.totalorder %s420, %s421
      %p435 = scmp.eq.s32.totalorder %s31, 1
      %p436 = por %p434, %p435
      %p438 = scmp.ne.s32.totalorder %s421, %s437
      %p439 = scmp.eq.s32.totalorder %s31, 0
      %p440 = por %p438, %p439
      %s441 = ssub.s32 %s33, %s40
      %p442 = scmp.eq.s32.totalorder %s441, 0
      %s444 = sadd.s32 %s443, 1
      %s445 = scalar_select %p442, %s443, %s444
      %p448 = pneg %p442
      %p449 = scmp.eq.s32.totalorder %s25, 1
      %p450 = por %p448, %p449
      %p451 = scmp.ne.s32.totalorder %s443, %s446
      %p452 = scmp.eq.s32.totalorder %s25, 0
      %p453 = por %p451, %p452
      %p454 = scmp.ne.s32.totalorder %s443, %s446
      %p455 = scmp.eq.s32.totalorder %s30, 1
      %p456 = por %p454, %p455
      %p457 = scmp.ne.s32.totalorder %s446, %s447
      %p458 = scmp.eq.s32.totalorder %s30, 0
      %p459 = por %p457, %p458
      %p460 = scmp.ne.s32.totalorder %s446, %s447
      %p461 = scmp.eq.s32.totalorder %s31, 1
      %p462 = por %p460, %p461
      %p464 = scmp.ne.s32.totalorder %s447, %s463
      %p465 = scmp.eq.s32.totalorder %s31, 0
      %p466 = por %p464, %p465
      %s467 = ssub.s32 %s33, %s40
      %p468 = scmp.eq.s32.totalorder %s467, 0
      %s470 = sadd.s32 %s469, 1
      %s471 = scalar_select %p468, %s469, %s470
      %p474 = pneg %p468
      %p475 = scmp.eq.s32.totalorder %s25, 1
      %p476 = por %p474, %p475
      %p477 = scmp.ne.s32.totalorder %s469, %s472
      %p478 = scmp.eq.s32.totalorder %s25, 0
      %p479 = por %p477, %p478
      %p480 = scmp.ne.s32.totalorder %s469, %s472
      %p481 = scmp.eq.s32.totalorder %s30, 1
      %p482 = por %p480, %p481
      %p483 = scmp.ne.s32.totalorder %s472, %s473
      %p484 = scmp.eq.s32.totalorder %s30, 0
      %p485 = por %p483, %p484
      %p486 = scmp.ne.s32.totalorder %s472, %s473
      %p487 = scmp.eq.s32.totalorder %s31, 1
      %p488 = por %p486, %p487
      %p490 = scmp.ne.s32.totalorder %s473, %s489
      %p491 = scmp.eq.s32.totalorder %s31, 0
      %p492 = por %p490, %p491
      %s493 = ssub.s32 %s32, %s44
      %p494 = scmp.eq.s32.totalorder %s493, 0
      %s496 = sadd.s32 %s495, 1
      %s497 = scalar_select %p494, %s495, %s496
      %p500 = pneg %p494
      %p501 = scmp.eq.s32.totalorder %s25, 1
      %p502 = por %p500, %p501
      %p503 = scmp.ne.s32.totalorder %s495, %s498
      %p504 = scmp.eq.s32.totalorder %s25, 0
      %p505 = por %p503, %p504
      %p506 = scmp.ne.s32.totalorder %s495, %s498
      %p507 = scmp.eq.s32.totalorder %s30, 1
      %p508 = por %p506, %p507
      %p509 = scmp.ne.s32.totalorder %s498, %s499
      %p510 = scmp.eq.s32.totalorder %s30, 0
      %p511 = por %p509, %p510
      %p512 = scmp.ne.s32.totalorder %s498, %s499
      %p513 = scmp.eq.s32.totalorder %s31, 1
      %p514 = por %p512, %p513
      %p516 = scmp.ne.s32.totalorder %s499, %s515
      %p517 = scmp.eq.s32.totalorder %s31, 0
      %p518 = por %p516, %p517
      %p519 = scmp.le.s32.totalorder 1, %s25
      %p520 = scmp.lt.s32.totalorder %s25, 3
      %p521 = pnand %p519, %p520
      %p522 = pneg %p521
      // Predicated region
      $region9: #{albert_unshared_forward.1} parent=5 // pred_check
        _
      $region10: #{albert_unshared_forward.1} parent=5 // pred_check_branch
        %524 = sbr.rel (%p521) target = $region12
      $region11: #{albert_unshared_forward.1} parent=5 // pred_region
        %s525 = ssub.s32 %s25, 1
        // Predicated region
        $region13: #{albert_unshared_forward.1} parent=11 // pred_check
          %p526 = pneg %p63
        $region14: #{albert_unshared_forward.1} parent=11 // pred_check_branch
          %528 = sbr.rel (%p526) target = $region16
        $region15: #{albert_unshared_forward.1} parent=11 // pred_region
          %s529 = smul.u32 2, %s34
          %p530 = scmp.lt.s32.totalorder %s529, 1
          %s531 = scalar_select %p530, %s529, 1
          %s532 = smul.addr %s531, 8
          %s533 = scalar_lea.vmem %s0, %s532
          %s534 = smul.u32 2, %s34
        $region16: #{albert_unshared_forward.1} parent=11 // pred_fallthru
          _
        // Predicated region
        $region17: #{albert_unshared_forward.1} parent=11 // pred_check
          %p535 = pneg %p89
        $region18: #{albert_unshared_forward.1} parent=11 // pred_check_branch
          %537 = sbr.rel (%p535) target = $region20
        $region19: #{albert_unshared_forward.1} parent=11 // pred_region
          %p538 = scmp.lt.s32.totalorder %s34, 0
          %s539 = scalar_select %p538, %s34, 0
          %s540 = smul.addr %s539, 2
          %s541 = smul.addr %s540, 8
          %s542 = scalar_lea.vmem %s1, %s541
        $region20: #{albert_unshared_forward.1} parent=11 // pred_fallthru
          _
        // Predicated region
        $region21: #{albert_unshared_forward.1} parent=11 // pred_check
          %p543 = pneg %p110
        $region22: #{albert_unshared_forward.1} parent=11 // pred_check_branch
          %545 = sbr.rel (%p543) target = $region24
        $region23: #{albert_unshared_forward.1} parent=11 // pred_region
          _
        $region24: #{albert_unshared_forward.1} parent=11 // pred_fallthru
          _
        // Predicated region
        $region25: #{albert_unshared_forward.1} parent=11 // pred_check
          %p546 = pneg %p131
        $region26: #{albert_unshared_forward.1} parent=11 // pred_check_branch
          %548 = sbr.rel (%p546) target = $region28
        $region27: #{albert_unshared_forward.1} parent=11 // pred_region
          _
        $region28: #{albert_unshared_forward.1} parent=11 // pred_fallthru
          _
        // Predicated region
        $region29: #{albert_unshared_forward.1} parent=11 // pred_check
          %p549 = pneg %p152
        $region30: #{albert_unshared_forward.1} parent=11 // pred_check_branch
          %551 = sbr.rel (%p549) target = $region32
        $region31: #{albert_unshared_forward.1} parent=11 // pred_region
          _
        $region32: #{albert_unshared_forward.1} parent=11 // pred_fallthru
          _
        // Predicated region
        $region33: #{albert_unshared_forward.1} parent=11 // pred_check
          %p552 = pneg %p173
        $region34: #{albert_unshared_forward.1} parent=11 // pred_check_branch
          %554 = sbr.rel (%p552) target = $region36
        $region35: #{albert_unshared_forward.1} parent=11 // pred_region
          _
        $region36: #{albert_unshared_forward.1} parent=11 // pred_fallthru
          _
      $region12: #{albert_unshared_forward.1} parent=5 // pred_fallthru
        _
      %p555 = scmp.lt.s32.totalorder %s25, 2
      // Predicated region
      $region37: #{albert_unshared_forward.1} parent=5 // pred_check
        %p556 = pneg %p555
      $region38: #{albert_unshared_forward.1} parent=5 // pred_check_branch
        %558 = sbr.rel (%p556) target = $region40
      $region39: #{albert_unshared_forward.1} parent=5 // pred_region
        // Predicated region
        $region41: #{albert_unshared_forward.1} parent=39 // pred_check
          %p559 = pneg %p193
        $region42: #{albert_unshared_forward.1} parent=39 // pred_check_branch
          %561 = sbr.rel (%p559) target = $region44
        $region43: #{albert_unshared_forward.1} parent=39 // pred_region
          %p562 = scmp.lt.s32.totalorder %s33, 1
          %s563 = scalar_select %p562, %s33, 1
          %s564 = smul.addr %s563, 4
          %s565 = smul.addr %s564, 4
          %s566 = scalar_lea.vmem %s6, %s565
        $region44: #{albert_unshared_forward.1} parent=39 // pred_fallthru
          _
        // Predicated region
        $region45: #{albert_unshared_forward.1} parent=39 // pred_check
          %p567 = pneg %p219
        $region46: #{albert_unshared_forward.1} parent=39 // pred_check_branch
          %569 = sbr.rel (%p567) target = $region48
        $region47: #{albert_unshared_forward.1} parent=39 // pred_region
          %p570 = scmp.lt.s32.totalorder %s33, 1
          %s571 = scalar_select %p570, %s33, 1
          %s572 = scalar_lea.vmem %s7, %s571
        $region48: #{albert_unshared_forward.1} parent=39 // pred_fallthru
          _
        // Predicated region
        $region49: #{albert_unshared_forward.1} parent=39 // pred_check
          %p573 = pneg %p245
        $region50: #{albert_unshared_forward.1} parent=39 // pred_check_branch
          %575 = sbr.rel (%p573) target = $region52
        $region51: #{albert_unshared_forward.1} parent=39 // pred_region
          %p576 = scmp.lt.s32.totalorder %s33, 1
          %s577 = scalar_select %p576, %s33, 1
          %s578 = smul.addr %s577, 4
          %s579 = smul.addr %s578, 4
          %s580 = scalar_lea.vmem %s8, %s579
        $region52: #{albert_unshared_forward.1} parent=39 // pred_fallthru
          _
        // Predicated region
        $region53: #{albert_unshared_forward.1} parent=39 // pred_check
          %p581 = pneg %p271
        $region54: #{albert_unshared_forward.1} parent=39 // pred_check_branch
          %583 = sbr.rel (%p581) target = $region56
        $region55: #{albert_unshared_forward.1} parent=39 // pred_region
          %p584 = scmp.lt.s32.totalorder %s33, 1
          %s585 = scalar_select %p584, %s33, 1
          %s586 = scalar_lea.vmem %s9, %s585
        $region56: #{albert_unshared_forward.1} parent=39 // pred_fallthru
          _
        // Predicated region
        $region57: #{albert_unshared_forward.1} parent=39 // pred_check
          %p587 = pneg %p297
        $region58: #{albert_unshared_forward.1} parent=39 // pred_check_branch
          %589 = sbr.rel (%p587) target = $region60
        $region59: #{albert_unshared_forward.1} parent=39 // pred_region
          %p590 = scmp.lt.s32.totalorder %s33, 1
          %s591 = scalar_select %p590, %s33, 1
          %s592 = scalar_lea.vmem %s10, %s591
        $region60: #{albert_unshared_forward.1} parent=39 // pred_fallthru
          _
        // Predicated region
        $region61: #{albert_unshared_forward.1} parent=39 // pred_check
          %p593 = pneg %p323
        $region62: #{albert_unshared_forward.1} parent=39 // pred_check_branch
          %595 = sbr.rel (%p593) target = $region64
        $region63: #{albert_unshared_forward.1} parent=39 // pred_region
          %p596 = scmp.lt.s32.totalorder %s33, 1
          %s597 = scalar_select %p596, %s33, 1
          %s598 = scalar_lea.vmem %s11, %s597
        $region64: #{albert_unshared_forward.1} parent=39 // pred_fallthru
          _
        // Predicated region
        $region65: #{albert_unshared_forward.1} parent=39 // pred_check
          %p599 = pneg %p349
        $region66: #{albert_unshared_forward.1} parent=39 // pred_check_branch
          %601 = sbr.rel (%p599) target = $region68
        $region67: #{albert_unshared_forward.1} parent=39 // pred_region
          %p602 = scmp.lt.s32.totalorder %s33, 1
          %s603 = scalar_select %p602, %s33, 1
          %s604 = smul.addr %s603, 4
          %s605 = smul.addr %s604, 4
          %s606 = scalar_lea.vmem %s12, %s605
        $region68: #{albert_unshared_forward.1} parent=39 // pred_fallthru
          _
        // Predicated region
        $region69: #{albert_unshared_forward.1} parent=39 // pred_check
          %p607 = pneg %p375
        $region70: #{albert_unshared_forward.1} parent=39 // pred_check_branch
          %609 = sbr.rel (%p607) target = $region72
        $region71: #{albert_unshared_forward.1} parent=39 // pred_region
          %p610 = scmp.lt.s32.totalorder %s33, 1
          %s611 = scalar_select %p610, %s33, 1
          %s612 = scalar_lea.vmem %s13, %s611
        $region72: #{albert_unshared_forward.1} parent=39 // pred_fallthru
          _
        // Predicated region
        $region73: #{albert_unshared_forward.1} parent=39 // pred_check
          %p613 = pneg %p401
        $region74: #{albert_unshared_forward.1} parent=39 // pred_check_branch
          %615 = sbr.rel (%p613) target = $region76
        $region75: #{albert_unshared_forward.1} parent=39 // pred_region
          %p616 = scmp.lt.s32.totalorder %s33, 1
          %s617 = scalar_select %p616, %s33, 1
          %s618 = smul.addr %s617, 8
          %s619 = smul.addr %s618, 4
          %s620 = scalar_lea.vmem %s14, %s619
        $region76: #{albert_unshared_forward.1} parent=39 // pred_fallthru
          _
        // Predicated region
        $region77: #{albert_unshared_forward.1} parent=39 // pred_check
          %p621 = pneg %p427
        $region78: #{albert_unshared_forward.1} parent=39 // pred_check_branch
          %623 = sbr.rel (%p621) target = $region80
        $region79: #{albert_unshared_forward.1} parent=39 // pred_region
          %p624 = scmp.lt.s32.totalorder %s33, 1
          %s625 = scalar_select %p624, %s33, 1
          %s626 = scalar_lea.vmem %s15, %s625
        $region80: #{albert_unshared_forward.1} parent=39 // pred_fallthru
          _
        // Predicated region
        $region81: #{albert_unshared_forward.1} parent=39 // pred_check
          %p627 = pneg %p453
        $region82: #{albert_unshared_forward.1} parent=39 // pred_check_branch
          %629 = sbr.rel (%p627) target = $region84
        $region83: #{albert_unshared_forward.1} parent=39 // pred_region
          %p630 = scmp.lt.s32.totalorder %s33, 1
          %s631 = scalar_select %p630, %s33, 1
          %s632 = scalar_lea.vmem %s16, %s631
        $region84: #{albert_unshared_forward.1} parent=39 // pred_fallthru
          _
        // Predicated region
        $region85: #{albert_unshared_forward.1} parent=39 // pred_check
          %p633 = pneg %p479
        $region86: #{albert_unshared_forward.1} parent=39 // pred_check_branch
          %635 = sbr.rel (%p633) target = $region88
        $region87: #{albert_unshared_forward.1} parent=39 // pred_region
          %p636 = scmp.lt.s32.totalorder %s33, 1
          %s637 = scalar_select %p636, %s33, 1
          %s638 = scalar_lea.vmem %s17, %s637
        $region88: #{albert_unshared_forward.1} parent=39 // pred_fallthru
          _
      $region40: #{albert_unshared_forward.1} parent=5 // pred_fallthru
        _
      %p639 = scmp.le.s32.totalorder 1, %s25
      %p640 = scmp.lt.s32.totalorder %s25, 3
      %p641 = pnand %p639, %p640
      %p642 = pneg %p641
      // Predicated region
      $region89: #{albert_unshared_forward.1} parent=5 // pred_check
        _
      $region90: #{albert_unshared_forward.1} parent=5 // pred_check_branch
        %644 = sbr.rel (%p641) target = $region92
      $region91: #{albert_unshared_forward.1} parent=5 // pred_region
        %s645 = ssub.s32 %s25, 1
        %s646 = smul.u32 2, %s34
        %p647 = scmp.lt.s32.totalorder %s646, 1
        %s648 = scalar_select %p647, %s646, 1
        %s649 = smul.addr %s648, 8
        %s650 = scalar_lea.vmem %s0, %s649
        %p651 = pneg %p63
        %p652 = pneg %p60
        %p653 = scmp.lt.s32.totalorder %s34, 0
        %s654 = scalar_select %p653, %s34, 0
        %s655 = smul.addr %s654, 2
        %s656 = smul.addr %s655, 8
        %s657 = scalar_lea.vmem %s1, %s656
        %p658 = pneg %p89
        %p659 = pneg %p86
        %p660 = pneg %p110
        %p661 = pneg %p107
        %p662 = pneg %p131
        %p663 = pneg %p128
        %p664 = pneg %p152
        %p665 = pneg %p149
        %p666 = pneg %p173
        %p667 = pneg %p170
        %p668 = scmp.lt.s32.totalorder %s35, 1
        %s669 = scalar_select %p668, %s35, 1
        %s670 = smul.addr %s669, 4
        %s671 = smul.addr %s670, 4
        %s672 = scalar_lea.vmem %s6, %s671
        %p673 = pneg %p199
        %p674 = pneg %p196
        %p675 = scmp.lt.s32.totalorder %s35, 1
        %s676 = scalar_select %p675, %s35, 1
        %s677 = scalar_lea.vmem %s7, %s676
        %p678 = pneg %p225
        %p679 = pneg %p222
        %p680 = scmp.lt.s32.totalorder %s35, 1
        %s681 = scalar_select %p680, %s35, 1
        %s682 = smul.addr %s681, 4
        %s683 = smul.addr %s682, 4
        %s684 = scalar_lea.vmem %s8, %s683
        %p685 = pneg %p251
        %p686 = pneg %p248
        %p687 = scmp.lt.s32.totalorder %s35, 1
        %s688 = scalar_select %p687, %s35, 1
        %s689 = scalar_lea.vmem %s9, %s688
        %p690 = pneg %p277
        %p691 = pneg %p274
        %p692 = scmp.lt.s32.totalorder %s35, 1
        %s693 = scalar_select %p692, %s35, 1
        %s694 = scalar_lea.vmem %s10, %s693
        %p695 = pneg %p303
        %p696 = pneg %p300
        %p697 = scmp.lt.s32.totalorder %s35, 1
        %s698 = scalar_select %p697, %s35, 1
        %s699 = scalar_lea.vmem %s11, %s698
        %p700 = pneg %p329
        %p701 = pneg %p326
        %p702 = scmp.lt.s32.totalorder %s35, 1
        %s703 = scalar_select %p702, %s35, 1
        %s704 = smul.addr %s703, 4
        %s705 = smul.addr %s704, 4
        %s706 = scalar_lea.vmem %s12, %s705
        %p707 = pneg %p355
        %p708 = pneg %p352
        %p709 = scmp.lt.s32.totalorder %s35, 1
        %s710 = scalar_select %p709, %s35, 1
        %s711 = scalar_lea.vmem %s13, %s710
        %p712 = pneg %p381
        %p713 = pneg %p378
        %p714 = scmp.lt.s32.totalorder %s35, 1
        %s715 = scalar_select %p714, %s35, 1
        %s716 = smul.addr %s715, 8
        %s717 = smul.addr %s716, 4
        %s718 = scalar_lea.vmem %s14, %s717
        %p719 = pneg %p407
        %p720 = pneg %p404
        %p721 = scmp.lt.s32.totalorder %s35, 1
        %s722 = scalar_select %p721, %s35, 1
        %s723 = scalar_lea.vmem %s15, %s722
        %p724 = pneg %p433
        %p725 = pneg %p430
        %p726 = scmp.lt.s32.totalorder %s35, 1
        %s727 = scalar_select %p726, %s35, 1
        %s728 = scalar_lea.vmem %s16, %s727
        %p729 = pneg %p459
        %p730 = pneg %p456
        %p731 = scmp.lt.s32.totalorder %s35, 1
        %s732 = scalar_select %p731, %s35, 1
        %s733 = scalar_lea.vmem %s17, %s732
        %p734 = pneg %p485
        %p735 = pneg %p482
        %p736 = pneg %p511
        %p737 = pneg %p508
        %s738 = smul.u32 2, %s34
        %p739 = scmp.lt.s32.totalorder %s738, 1
        %s740 = scalar_select %p739, %s738, 1
        %s741 = smul.addr %s740, 8
        %s742 = scalar_lea.vmem %s0, %s741
        %s743 = smul.u32 2, %s34
        %p744 = scmp.lt.s32.totalorder %s34, 0
        %s745 = scalar_select %p744, %s34, 0
        %s746 = smul.addr %s745, 2
        %s747 = smul.addr %s746, 8
        %s748 = scalar_lea.vmem %s1, %s747
        %p749 = scmp.lt.s32.totalorder %s35, 1
        %s750 = scalar_select %p749, %s35, 1
        %s751 = smul.addr %s750, 4
        %s752 = smul.addr %s751, 4
        %s753 = scalar_lea.vmem %s6, %s752
        %p754 = scmp.lt.s32.totalorder %s35, 1
        %s755 = scalar_select %p754, %s35, 1
        %s756 = scalar_lea.vmem %s7, %s755
        %p757 = scmp.lt.s32.totalorder %s35, 1
        %s758 = scalar_select %p757, %s35, 1
        %s759 = smul.addr %s758, 4
        %s760 = smul.addr %s759, 4
        %s761 = scalar_lea.vmem %s8, %s760
        %p762 = scmp.lt.s32.totalorder %s35, 1
        %s763 = scalar_select %p762, %s35, 1
        %s764 = scalar_lea.vmem %s9, %s763
        %p765 = scmp.lt.s32.totalorder %s35, 1
        %s766 = scalar_select %p765, %s35, 1
        %s767 = scalar_lea.vmem %s10, %s766
        %p768 = scmp.lt.s32.totalorder %s35, 1
        %s769 = scalar_select %p768, %s35, 1
        %s770 = scalar_lea.vmem %s11, %s769
        %p771 = scmp.lt.s32.totalorder %s35, 1
        %s772 = scalar_select %p771, %s35, 1
        %s773 = smul.addr %s772, 4
        %s774 = smul.addr %s773, 4
        %s775 = scalar_lea.vmem %s12, %s774
        %p776 = scmp.lt.s32.totalorder %s35, 1
        %s777 = scalar_select %p776, %s35, 1
        %s778 = scalar_lea.vmem %s13, %s777
        %p779 = scmp.lt.s32.totalorder %s35, 1
        %s780 = scalar_select %p779, %s35, 1
        %s781 = smul.addr %s780, 8
        %s782 = smul.addr %s781, 4
        %s783 = scalar_lea.vmem %s14, %s782
        %p784 = scmp.lt.s32.totalorder %s35, 1
        %s785 = scalar_select %p784, %s35, 1
        %s786 = scalar_lea.vmem %s15, %s785
        %p787 = scmp.lt.s32.totalorder %s35, 1
        %s788 = scalar_select %p787, %s35, 1
        %s789 = scalar_lea.vmem %s16, %s788
        %p790 = scmp.lt.s32.totalorder %s35, 1
        %s791 = scalar_select %p790, %s35, 1
        %s792 = scalar_lea.vmem %s17, %s791
        %s793 = smul.u32 2, %s34
        %p795 = scmp.eq.s32.totalorder %s35, 0
        // Predicated region
        $region93: #{albert_unshared_forward.1} parent=91 // pred_check
          %p796 = pneg %p795
        $region94: #{albert_unshared_forward.1} parent=91 // pred_check_branch
          %798 = sbr.rel (%p796) target = $region96
        $region95: #{albert_unshared_forward.1} parent=91 // pred_region
          %v799 = vld [vmem:[%s742] sm:$0xff]
          %v800 = vld [vmem:[%s742 + $0x8] sm:$0xff]
          %v801 = vld [vmem:[%s2] sm:$0x1]
          %v802 = vld [vmem:[%s3] sm:$0x1]
          %vm803 = vcmask 130048
          %v804 = vsel %vm803, %v799, 0.0
          %805 = vadd.xlane.f32.xlu0 %v804
          %v806 = vpop.xlane.xlu0 %805
          %v807 = vsel %vm803, %v800, 0.0
          %808 = vadd.xlane.f32.xlu0 %v807
          %v809 = vpop.xlane.xlu0 %808
          %v810 = vrcp.pop 16.0
          %v811 = vmul.f32 %v806, %v810
          %v812 = vmul.f32 %v809, %v810
          %v813 = vsub.f32 %v799, %v811
          %v814 = vsub.f32 %v800, %v812
          %v815 = vmul.f32 %v813, %v813
          %v816 = vmul.f32 %v814, %v814
          %v817 = vsel %vm803, %v815, 0.0
          %818 = vadd.xlane.f32.xlu0 %v817
          %v819 = vpop.xlane.xlu0 %818
          %v820 = vsel %vm803, %v816, 0.0
          %821 = vadd.xlane.f32.xlu0 %v820
          %v822 = vpop.xlane.xlu0 %821
          %v823 = vmul.f32 %v819, %v810
          %v824 = vmul.f32 %v822, %v810
          %v825 = vadd.f32 %v823, 1e-12
          %v826 = vadd.f32 %v824, 1e-12
          %v827 = vrsqrt.pop %v825
          %v828 = vrsqrt.pop %v826
          %v829 = vmul.f32 %v813, %v827
          %v830 = vmul.f32 %v814, %v828
          %v832 = vlaneseq
          %v833 = vshrl.u32 %v832, 7
          %v834 = vsub.s32 0, %v833
          %v835 = vrot.slane %v801, %v834
          %v837 = vmul.f32 %v829, %v835
          %v838 = vmul.f32 %v830, %v835
          %v840 = vlaneseq
          %v841 = vshrl.u32 %v840, 7
          %v842 = vsub.s32 0, %v841
          %v843 = vrot.slane %v802, %v842
          %v845 = vadd.f32 %v837, %v843
          %v846 = vadd.f32 %v838, %v843
          %v847 = vld [vmem:[%s4] sm:$0xf]
          %v848 = vld [vmem:[%s4 + $0x4] sm:$0xf]
          %v849 = vpack.c.bf16 %v846, %v845
          %v850 = vld [vmem:[%s5] sm:$0x1]
          %v852 = vlaneseq
          %v853 = vshrl.u32 %v852, 7
          %v854 = vsub.s32 0, %v853
          %v855 = vrot.slane %v850, %v854
          %v859 = vunpack.c.l.b16 %v847
          %v860 = vunpack.c.l.b16 %v848
          %v861 = vpack.c.b16 %v860, %v859
          %v864 = vsel %vm803, %v849, 0
          %866 = vmatprep.subr.bf16.mxu0 0
          %867 = vmatpush1.bf16.msra.mxu0 %v861
          %868 = vmatprep.subr.bf16.mxu0 0
          %869 = vmatpush1.bf16.msra.mxu0 0
          %870 = vmatprep.subr.bf16.mxu0 0
          %871 = vmatpush1.bf16.msra.mxu0 0
          %872 = vmatprep.subr.bf16.mxu0 0
          %873 = vmatpush1.bf16.msra.mxu0 0
          %874 = vmatprep.subr.bf16.mxu0 0
          %875 = vmatpush1.bf16.msra.mxu0 0
          %876 = vmatprep.subr.bf16.mxu0 0
          %877 = vmatpush1.bf16.msra.mxu0 0
          %878 = vmatprep.subr.bf16.mxu0 0
          %879 = vmatpush1.bf16.msra.mxu0 0
          %880 = vmatprep.subr.bf16.mxu0 0
          %881 = vmatpush1.bf16.msra.mxu0 0
          %882 = vmatprep.subr.bf16.mxu0 0
          %883 = vmatpush1.bf16.msra.mxu0 0
          %884 = vmatprep.subr.bf16.mxu0 0
          %885 = vmatpush1.bf16.msra.mxu0 0
          %886 = vmatprep.subr.bf16.mxu0 0
          %887 = vmatpush1.bf16.msra.mxu0 0
          %888 = vmatprep.subr.bf16.mxu0 0
          %889 = vmatpush1.bf16.msra.mxu0 0
          %890 = vmatprep.subr.bf16.mxu0 0
          %891 = vmatpush1.bf16.msra.mxu0 0
          %892 = vmatprep.subr.bf16.mxu0 0
          %893 = vmatpush1.bf16.msra.mxu0 0
          %894 = vmatprep.subr.bf16.mxu0 0
          %895 = vmatpush1.bf16.msra.mxu0 0
          %896 = vmatprep.subr.bf16.mxu0 0
          %897 = vmatpush1.bf16.msra.mxu0 0
          %898 = vmatprep.mubr.bf16.mxu0 0
          %899 = vmatmul.mubr.bf16.gmra.mrb[0].mxu0 %v864
          %v900 = vpop.f32.mrb[0].mxu0
          %v901 = vadd.f32 %v855, %v900
          %v902 = vpop.f32.mrb[0].mxu0
          %v903 = vpop.f32.mrb[0].mxu0
          %v904 = vadd.f32 %v855, %v903
          %v905 = vpop.f32.mrb[0].mxu0
          %906 = vdwg.mxu0
          %vm907 = vcmask 261120
          %908 = vst.msk [vmem:[#allocation2] sm:$0xff] %vm907, %v901
          %909 = vst.msk [vmem:[#allocation2 + $0x8] sm:$0xff] %vm907, %v904
        $region96: #{albert_unshared_forward.1} parent=91 // pred_fallthru
          _
        %v910 = vld [vmem:[#allocation2] sm:$0xff]
        %v911 = vld [vmem:[#allocation2 + $0x8] sm:$0xff]
        %v912 = vld [vmem:[%s753] sm:$0xf]
        %v913 = vld [vmem:[%s753 + $0x4] sm:$0xf]
        %v914 = vld [vmem:[%s753 + $0x8] sm:$0xf]
        %v915 = vld [vmem:[%s753 + $0xc] sm:$0xf]
        %v916 = vpack.c.bf16 %v911, %v910
        %v917 = vld [vmem:[%s756] sm:$0x1]
        %v919 = vlaneseq
        %v920 = vshrl.u32 %v919, 7
        %v921 = vsub.s32 0, %v920
        %v922 = vrot.slane %v917, %v921
        %v928 = vunpack.c.l.b16 %v912
        %v929 = vunpack.c.l.b16 %v913
        %v930 = vunpack.c.l.b16 %v914
        %v931 = vunpack.c.l.b16 %v915
        %v932 = vpack.c.b16 %v929, %v928
        %v933 = vpack.c.b16 %v931, %v930
        %vm936 = vcmask 261120
        %v938 = vsel %vm936, %v916, 0
        %940 = vmatprep.subr.bf16.mxu0 0
        %941 = vmatpush1.bf16.msra.mxu0 %v932
        %942 = vmatprep.subr.bf16.mxu0 0
        %943 = vmatpush1.bf16.msra.mxu0 %v933
        %944 = vmatprep.subr.bf16.mxu0 0
        %945 = vmatpush1.bf16.msra.mxu0 0
        %946 = vmatprep.subr.bf16.mxu0 0
        %947 = vmatpush1.bf16.msra.mxu0 0
        %948 = vmatprep.subr.bf16.mxu0 0
        %949 = vmatpush1.bf16.msra.mxu0 0
        %950 = vmatprep.subr.bf16.mxu0 0
        %951 = vmatpush1.bf16.msra.mxu0 0
        %952 = vmatprep.subr.bf16.mxu0 0
        %953 = vmatpush1.bf16.msra.mxu0 0
        %954 = vmatprep.subr.bf16.mxu0 0
        %955 = vmatpush1.bf16.msra.mxu0 0
        %956 = vmatprep.subr.bf16.mxu0 0
        %957 = vmatpush1.bf16.msra.mxu0 0
        %958 = vmatprep.subr.bf16.mxu0 0
        %959 = vmatpush1.bf16.msra.mxu0 0
        %960 = vmatprep.subr.bf16.mxu0 0
        %961 = vmatpush1.bf16.msra.mxu0 0
        %962 = vmatprep.subr.bf16.mxu0 0
        %963 = vmatpush1.bf16.msra.mxu0 0
        %964 = vmatprep.subr.bf16.mxu0 0
        %965 = vmatpush1.bf16.msra.mxu0 0
        %966 = vmatprep.subr.bf16.mxu0 0
        %967 = vmatpush1.bf16.msra.mxu0 0
        %968 = vmatprep.subr.bf16.mxu0 0
        %969 = vmatpush1.bf16.msra.mxu0 0
        %970 = vmatprep.subr.bf16.mxu0 0
        %971 = vmatpush1.bf16.msra.mxu0 0
        %972 = vmatprep.mubr.bf16.mxu0 0
        %973 = vmatmul.mubr.bf16.gmra.mrb[0].mxu0 %v938
        %v974 = vpop.f32.mrb[0].mxu0
        %v975 = vadd.f32 %v922, %v974
        %v976 = vpop.f32.mrb[0].mxu0
        %v977 = vpop.f32.mrb[0].mxu0
        %v978 = vadd.f32 %v922, %v977
        %v979 = vpop.f32.mrb[0].mxu0
        %980 = vdwg.mxu0
        %v981 = vld [vmem:[%s748] sm:$0xff]
        %v982 = vld [vmem:[%s748 + $0x8] sm:$0xff]
        %v983 = vld [vmem:[%s761] sm:$0xf]
        %v984 = vld [vmem:[%s761 + $0x4] sm:$0xf]
        %v985 = vld [vmem:[%s761 + $0x8] sm:$0xf]
        %v986 = vld [vmem:[%s761 + $0xc] sm:$0xf]
        %v987 = vpack.c.bf16 %v978, %v975
        %989 = vrot.lane.b32.xlu0 %v987, 96
        %v990 = vpop.permute.xlu0 %989
        %vm991 = vcmask 64512
        %v993 = vsel %vm991, %v987, 0
        %v996 = vsel %vm991, %v990, 0
        %998 = vmatprep.subr.bf16.mxu0 0
        %999 = vmatpush1.bf16.xpose.msra.mxu0 %v996
        %1000 = vmatprep.subr.bf16.mxu0 0
        %1001 = vmatpush1.bf16.xpose.msra.mxu0 0
        %1002 = vmatprep.subr.bf16.mxu0 0
        %1003 = vmatpush1.bf16.xpose.msra.mxu0 0
        %1004 = vmatprep.subr.bf16.mxu0 0
        %1005 = vmatpush1.bf16.xpose.msra.mxu0 0
        %1006 = vmatprep.subr.bf16.mxu0 0
        %1007 = vmatpush1.bf16.xpose.msra.mxu0 0
        %1008 = vmatprep.subr.bf16.mxu0 0
        %1009 = vmatpush1.bf16.xpose.msra.mxu0 0
        %1010 = vmatprep.subr.bf16.mxu0 0
        %1011 = vmatpush1.bf16.xpose.msra.mxu0 0
        %1012 = vmatprep.subr.bf16.mxu0 0
        %1013 = vmatpush1.bf16.xpose.msra.mxu0 0
        %1014 = vmatprep.subr.bf16.mxu0 0
        %1015 = vmatpush1.bf16.xpose.msra.mxu0 0
        %1016 = vmatprep.subr.bf16.mxu0 0
        %1017 = vmatpush1.bf16.xpose.msra.mxu0 0
        %1018 = vmatprep.subr.bf16.mxu0 0
        %1019 = vmatpush1.bf16.xpose.msra.mxu0 0
        %1020 = vmatprep.subr.bf16.mxu0 0
        %1021 = vmatpush1.bf16.xpose.msra.mxu0 0
        %1022 = vmatprep.subr.bf16.mxu0 0
        %1023 = vmatpush1.bf16.xpose.msra.mxu0 0
        %1024 = vmatprep.subr.bf16.mxu0 0
        %1025 = vmatpush1.bf16.xpose.msra.mxu0 0
        %1026 = vmatprep.subr.bf16.mxu0 0
        %1027 = vmatpush1.bf16.xpose.msra.mxu0 0
        %1028 = vmatprep.subr.bf16.mxu0 0
        %1029 = vmatpush1.bf16.xpose.msra.mxu0 0
        %1030 = vmatprep.mubr.bf16.mxu0 0
        %1031 = vmatmul.mubr.bf16.gmra.mrb[0].mxu0 %v993
        %v1032 = vpop.f32.mrb[0].mxu0
        %v1033 = vadd.f32 %v981, %v1032
        %v1034 = vpop.f32.mrb[0].mxu0
        %v1035 = vpop.f32.mrb[0].mxu0
        %v1036 = vadd.f32 %v982, %v1035
        %v1037 = vpop.f32.mrb[0].mxu0
        %1038 = vdwg.mxu0
        %vm1039 = vcmask 130048
        %v1040 = vsel %vm1039, %v1033, -inf
        %1041 = vmax.xlane.f32.xlu0 %v1040
        %v1042 = vpop.xlane.xlu0 %1041
        %v1043 = vsel %vm1039, %v1036, -inf
        %1044 = vmax.xlane.f32.xlu0 %v1043
        %v1045 = vpop.xlane.xlu0 %1044
        %v1046 = vsub.f32 %v1033, %v1042
        %v1047 = vsub.f32 %v1036, %v1045
        %v1048 = vmul.f32 %v1046, 1.442695
        %v1049 = vpow.pop %v1048
        %v1050 = vmul.f32 %v1047, 1.442695
        %v1051 = vpow.pop %v1050
        %v1052 = vsel %vm1039, %v1049, 0.0
        %1053 = vadd.xlane.f32.xlu0 %v1052
        %v1054 = vpop.xlane.xlu0 %1053
        %v1055 = vsel %vm1039, %v1051, 0.0
        %1056 = vadd.xlane.f32.xlu0 %v1055
        %v1057 = vpop.xlane.xlu0 %1056
        %v1058 = vrcp.pop %v1054
        %v1059 = vrcp.pop %v1057
        %v1060 = vmul.f32 %v1049, %v1058
        %v1061 = vmul.f32 %v1051, %v1059
        %v1062 = vpack.c.bf16 %v1061, %v1060
        %1063 = vrot.lane.b32.xlu0 %v987, 64
        %v1064 = vpop.permute.xlu0 %1063
        %v1067 = vsel %vm1039, %v1062, 0
        %1069 = vmatprep.subr.bf16.mxu0 0
        %1070 = vmatpush1.bf16.msra.mxu0 %v1064
        %1071 = vmatprep.subr.bf16.mxu0 0
        %1072 = vmatpush1.bf16.msra.mxu0 0
        %1073 = vmatprep.subr.bf16.mxu0 0
        %1074 = vmatpush1.bf16.msra.mxu0 0
        %1075 = vmatprep.subr.bf16.mxu0 0
        %1076 = vmatpush1.bf16.msra.mxu0 0
        %1077 = vmatprep.subr.bf16.mxu0 0
        %1078 = vmatpush1.bf16.msra.mxu0 0
        %1079 = vmatprep.subr.bf16.mxu0 0
        %1080 = vmatpush1.bf16.msra.mxu0 0
        %1081 = vmatprep.subr.bf16.mxu0 0
        %1082 = vmatpush1.bf16.msra.mxu0 0
        %1083 = vmatprep.subr.bf16.mxu0 0
        %1084 = vmatpush1.bf16.msra.mxu0 0
        %1085 = vmatprep.subr.bf16.mxu0 0
        %1086 = vmatpush1.bf16.msra.mxu0 0
        %1087 = vmatprep.subr.bf16.mxu0 0
        %1088 = vmatpush1.bf16.msra.mxu0 0
        %1089 = vmatprep.subr.bf16.mxu0 0
        %1090 = vmatpush1.bf16.msra.mxu0 0
        %1091 = vmatprep.subr.bf16.mxu0 0
        %1092 = vmatpush1.bf16.msra.mxu0 0
        %1093 = vmatprep.subr.bf16.mxu0 0
        %1094 = vmatpush1.bf16.msra.mxu0 0
        %1095 = vmatprep.subr.bf16.mxu0 0
        %1096 = vmatpush1.bf16.msra.mxu0 0
        %1097 = vmatprep.subr.bf16.mxu0 0
        %1098 = vmatpush1.bf16.msra.mxu0 0
        %1099 = vmatprep.subr.bf16.mxu0 0
        %1100 = vmatpush1.bf16.msra.mxu0 0
        %1101 = vmatprep.mubr.bf16.mxu0 0
        %1102 = vmatmul.mubr.bf16.gmra.mrb[0].mxu0 %v1067
        %v1103 = vpop.f32.mrb[0].mxu0
        %v1104 = vadd.f32 0.0, %v1103
        %v1105 = vpop.f32.mrb[0].mxu0
        %v1106 = vpop.f32.mrb[0].mxu0
        %v1107 = vadd.f32 0.0, %v1106
        %v1108 = vpop.f32.mrb[0].mxu0
        %1109 = vdwg.mxu0
        %v1110 = vpack.c.bf16 %v1107, %v1104
        %1111 = vrot.lane.b32.xlu0 %v987, 120
        %v1112 = vpop.permute.xlu0 %1111
        %1113 = vrot.lane.b32.xlu0 %v987, 88
        %v1114 = vpop.permute.xlu0 %1113
        %v1116 = vsel %vm991, %v1112, 0
        %v1119 = vsel %vm991, %v1114, 0
        %1121 = vmatprep.subr.bf16.mxu0 0
        %1122 = vmatpush1.bf16.xpose.msra.mxu0 %v1119
        %1123 = vmatprep.subr.bf16.mxu0 0
        %1124 = vmatpush1.bf16.xpose.msra.mxu0 0
        %1125 = vmatprep.subr.bf16.mxu0 0
        %1126 = vmatpush1.bf16.xpose.msra.mxu0 0
        %1127 = vmatprep.subr.bf16.mxu0 0
        %1128 = vmatpush1.bf16.xpose.msra.mxu0 0
        %1129 = vmatprep.subr.bf16.mxu0 0
        %1130 = vmatpush1.bf16.xpose.msra.mxu0 0
        %1131 = vmatprep.subr.bf16.mxu0 0
        %1132 = vmatpush1.bf16.xpose.msra.mxu0 0
        %1133 = vmatprep.subr.bf16.mxu0 0
        %1134 = vmatpush1.bf16.xpose.msra.mxu0 0
        %1135 = vmatprep.subr.bf16.mxu0 0
        %1136 = vmatpush1.bf16.xpose.msra.mxu0 0
        %1137 = vmatprep.subr.bf16.mxu0 0
        %1138 = vmatpush1.bf16.xpose.msra.mxu0 0
        %1139 = vmatprep.subr.bf16.mxu0 0
        %1140 = vmatpush1.bf16.xpose.msra.mxu0 0
        %1141 = vmatprep.subr.bf16.mxu0 0
        %1142 = vmatpush1.bf16.xpose.msra.mxu0 0
        %1143 = vmatprep.subr.bf16.mxu0 0
        %1144 = vmatpush1.bf16.xpose.msra.mxu0 0
        %1145 = vmatprep.subr.bf16.mxu0 0
        %1146 = vmatpush1.bf16.xpose.msra.mxu0 0
        %1147 = vmatprep.subr.bf16.mxu0 0
        %1148 = vmatpush1.bf16.xpose.msra.mxu0 0
        %1149 = vmatprep.subr.bf16.mxu0 0
        %1150 = vmatpush1.bf16.xpose.msra.mxu0 0
        %1151 = vmatprep.subr.bf16.mxu0 0
        %1152 = vmatpush1.bf16.xpose.msra.mxu0 0
        %1153 = vmatprep.mubr.bf16.mxu0 0
        %1154 = vmatmul.mubr.bf16.gmra.mrb[0].mxu0 %v1116
        %v1155 = vpop.f32.mrb[0].mxu0
        %v1156 = vadd.f32 %v981, %v1155
        %v1157 = vpop.f32.mrb[0].mxu0
        %v1158 = vpop.f32.mrb[0].mxu0
        %v1159 = vadd.f32 %v982, %v1158
        %v1160 = vpop.f32.mrb[0].mxu0
        %1161 = vdwg.mxu0
        %v1162 = vsel %vm1039, %v1156, -inf
        %1163 = vmax.xlane.f32.xlu0 %v1162
        %v1164 = vpop.xlane.xlu0 %1163
        %v1165 = vsel %vm1039, %v1159, -inf
        %1166 = vmax.xlane.f32.xlu0 %v1165
        %v1167 = vpop.xlane.xlu0 %1166
        %v1168 = vsub.f32 %v1156, %v1164
        %v1169 = vsub.f32 %v1159, %v1167
        %v1170 = vmul.f32 %v1168, 1.442695
        %v1171 = vpow.pop %v1170
        %v1172 = vmul.f32 %v1169, 1.442695
        %v1173 = vpow.pop %v1172
        %v1174 = vsel %vm1039, %v1171, 0.0
        %1175 = vadd.xlane.f32.xlu0 %v1174
        %v1176 = vpop.xlane.xlu0 %1175
        %v1177 = vsel %vm1039, %v1173, 0.0
        %1178 = vadd.xlane.f32.xlu0 %v1177
        %v1179 = vpop.xlane.xlu0 %1178
        %v1180 = vrcp.pop %v1176
        %v1181 = vrcp.pop %v1179
        %v1182 = vmul.f32 %v1171, %v1180
        %v1183 = vmul.f32 %v1173, %v1181
        %v1184 = vpack.c.bf16 %v1183, %v1182
        %1185 = vrot.lane.b32.xlu0 %v987, 56
        %v1186 = vpop.permute.xlu0 %1185
        %v1189 = vsel %vm1039, %v1184, 0
        %1191 = vmatprep.subr.bf16.mxu0 0
        %1192 = vmatpush1.bf16.msra.mxu0 %v1186
        %1193 = vmatprep.subr.bf16.mxu0 0
        %1194 = vmatpush1.bf16.msra.mxu0 0
        %1195 = vmatprep.subr.bf16.mxu0 0
        %1196 = vmatpush1.bf16.msra.mxu0 0
        %1197 = vmatprep.subr.bf16.mxu0 0
        %1198 = vmatpush1.bf16.msra.mxu0 0
        %1199 = vmatprep.subr.bf16.mxu0 0
        %1200 = vmatpush1.bf16.msra.mxu0 0
        %1201 = vmatprep.subr.bf16.mxu0 0
        %1202 = vmatpush1.bf16.msra.mxu0 0
        %1203 = vmatprep.subr.bf16.mxu0 0
        %1204 = vmatpush1.bf16.msra.mxu0 0
        %1205 = vmatprep.subr.bf16.mxu0 0
        %1206 = vmatpush1.bf16.msra.mxu0 0
        %1207 = vmatprep.subr.bf16.mxu0 0
        %1208 = vmatpush1.bf16.msra.mxu0 0
        %1209 = vmatprep.subr.bf16.mxu0 0
        %1210 = vmatpush1.bf16.msra.mxu0 0
        %1211 = vmatprep.subr.bf16.mxu0 0
        %1212 = vmatpush1.bf16.msra.mxu0 0
        %1213 = vmatprep.subr.bf16.mxu0 0
        %1214 = vmatpush1.bf16.msra.mxu0 0
        %1215 = vmatprep.subr.bf16.mxu0 0
        %1216 = vmatpush1.bf16.msra.mxu0 0
        %1217 = vmatprep.subr.bf16.mxu0 0
        %1218 = vmatpush1.bf16.msra.mxu0 0
        %1219 = vmatprep.subr.bf16.mxu0 0
        %1220 = vmatpush1.bf16.msra.mxu0 0
        %1221 = vmatprep.subr.bf16.mxu0 0
        %1222 = vmatpush1.bf16.msra.mxu0 0
        %1223 = vmatprep.mubr.bf16.mxu0 0
        %1224 = vmatmul.mubr.bf16.gmra.mrb[0].mxu0 %v1189
        %v1225 = vpop.f32.mrb[0].mxu0
        %v1226 = vadd.f32 0.0, %v1225
        %v1227 = vpop.f32.mrb[0].mxu0
        %v1228 = vpop.f32.mrb[0].mxu0
        %v1229 = vadd.f32 0.0, %v1228
        %v1230 = vpop.f32.mrb[0].mxu0
        %1231 = vdwg.mxu0
        %v1232 = vpack.c.bf16 %v1229, %v1226
        %v1234 = vsel %vm991, %v1232, 0
        %vm1236 = vcmask 1043456
        %v1238 = vsel %vm1236, %v984, 0
        %1240 = vmatprep.subr.bf16.mxu0 0
        %1241 = vmatpush1.bf16.msra.mxu0 %v1238
        %1242 = vmatprep.subr.bf16.mxu0 0
        %1243 = vmatpush1.bf16.msra.mxu0 0
        %1244 = vmatprep.subr.bf16.mxu0 0
        %1245 = vmatpush1.bf16.msra.mxu0 0
        %1246 = vmatprep.subr.bf16.mxu0 0
        %1247 = vmatpush1.bf16.msra.mxu0 0
        %1248 = vmatprep.subr.bf16.mxu0 0
        %1249 = vmatpush1.bf16.msra.mxu0 0
        %1250 = vmatprep.subr.bf16.mxu0 0
        %1251 = vmatpush1.bf16.msra.mxu0 0
        %1252 = vmatprep.subr.bf16.mxu0 0
        %1253 = vmatpush1.bf16.msra.mxu0 0
        %1254 = vmatprep.subr.bf16.mxu0 0
        %1255 = vmatpush1.bf16.msra.mxu0 0
        %1256 = vmatprep.subr.bf16.mxu0 0
        %1257 = vmatpush1.bf16.msra.mxu0 0
        %1258 = vmatprep.subr.bf16.mxu0 0
        %1259 = vmatpush1.bf16.msra.mxu0 0
        %1260 = vmatprep.subr.bf16.mxu0 0
        %1261 = vmatpush1.bf16.msra.mxu0 0
        %1262 = vmatprep.subr.bf16.mxu0 0
        %1263 = vmatpush1.bf16.msra.mxu0 0
        %1264 = vmatprep.subr.bf16.mxu0 0
        %1265 = vmatpush1.bf16.msra.mxu0 0
        %1266 = vmatprep.subr.bf16.mxu0 0
        %1267 = vmatpush1.bf16.msra.mxu0 0
        %1268 = vmatprep.subr.bf16.mxu0 0
        %1269 = vmatpush1.bf16.msra.mxu0 0
        %1270 = vmatprep.subr.bf16.mxu0 0
        %1271 = vmatpush1.bf16.msra.mxu0 0
        %1272 = vmatprep.mubr.bf16.mxu0 0
        %1273 = vmatmul.mubr.bf16.gmra.mrb[0].mxu0 %v1234
        %v1274 = vpop.f32.mrb[0].mxu0
        %v1275 = vadd.f32 0.0, %v1274
        %v1276 = vpop.f32.mrb[0].mxu0
        %v1277 = vpop.f32.mrb[0].mxu0
        %v1278 = vadd.f32 0.0, %v1277
        %v1279 = vpop.f32.mrb[0].mxu0
        %1280 = vdwg.mxu0
        %v1282 = vsel %vm991, %v1110, 0
        %v1285 = vsel %vm1236, %v983, 0
        %1287 = vmatprep.subr.bf16.mxu0 0
        %1288 = vmatpush1.bf16.msra.mxu0 %v1285
        %1289 = vmatprep.subr.bf16.mxu0 0
        %1290 = vmatpush1.bf16.msra.mxu0 0
        %1291 = vmatprep.subr.bf16.mxu0 0
        %1292 = vmatpush1.bf16.msra.mxu0 0
        %1293 = vmatprep.subr.bf16.mxu0 0
        %1294 = vmatpush1.bf16.msra.mxu0 0
        %1295 = vmatprep.subr.bf16.mxu0 0
        %1296 = vmatpush1.bf16.msra.mxu0 0
        %1297 = vmatprep.subr.bf16.mxu0 0
        %1298 = vmatpush1.bf16.msra.mxu0 0
        %1299 = vmatprep.subr.bf16.mxu0 0
        %1300 = vmatpush1.bf16.msra.mxu0 0
        %1301 = vmatprep.subr.bf16.mxu0 0
        %1302 = vmatpush1.bf16.msra.mxu0 0
        %1303 = vmatprep.subr.bf16.mxu0 0
        %1304 = vmatpush1.bf16.msra.mxu0 0
        %1305 = vmatprep.subr.bf16.mxu0 0
        %1306 = vmatpush1.bf16.msra.mxu0 0
        %1307 = vmatprep.subr.bf16.mxu0 0
        %1308 = vmatpush1.bf16.msra.mxu0 0
        %1309 = vmatprep.subr.bf16.mxu0 0
        %1310 = vmatpush1.bf16.msra.mxu0 0
        %1311 = vmatprep.subr.bf16.mxu0 0
        %1312 = vmatpush1.bf16.msra.mxu0 0
        %1313 = vmatprep.subr.bf16.mxu0 0
        %1314 = vmatpush1.bf16.msra.mxu0 0
        %1315 = vmatprep.subr.bf16.mxu0 0
        %1316 = vmatpush1.bf16.msra.mxu0 0
        %1317 = vmatprep.subr.bf16.mxu0 0
        %1318 = vmatpush1.bf16.msra.mxu0 0
        %1319 = vmatprep.mubr.bf16.mxu0 0
        %1320 = vmatmul.mubr.bf16.gmra.mrb[0].mxu0 %v1282
        %v1321 = vpop.f32.mrb[0].mxu0
        %v1322 = vadd.f32 %v1275, %v1321
        %v1323 = vpop.f32.mrb[0].mxu0
        %v1324 = vpop.f32.mrb[0].mxu0
        %v1325 = vadd.f32 %v1278, %v1324
        %v1326 = vpop.f32.mrb[0].mxu0
        %1327 = vdwg.mxu0
        %1328 = vrot.lane.b32.xlu0 %v987, 112
        %v1329 = vpop.permute.xlu0 %1328
        %1330 = vrot.lane.b32.xlu0 %v987, 80
        %v1331 = vpop.permute.xlu0 %1330
        %v1333 = vsel %vm991, %v1329, 0
        %v1336 = vsel %vm991, %v1331, 0
        %1338 = vmatprep.subr.bf16.mxu0 0
        %1339 = vmatpush1.bf16.xpose.msra.mxu0 %v1336
        %1340 = vmatprep.subr.bf16.mxu0 0
        %1341 = vmatpush1.bf16.xpose.msra.mxu0 0
        %1342 = vmatprep.subr.bf16.mxu0 0
        %1343 = vmatpush1.bf16.xpose.msra.mxu0 0
        %1344 = vmatprep.subr.bf16.mxu0 0
        %1345 = vmatpush1.bf16.xpose.msra.mxu0 0
        %1346 = vmatprep.subr.bf16.mxu0 0
        %1347 = vmatpush1.bf16.xpose.msra.mxu0 0
        %1348 = vmatprep.subr.bf16.mxu0 0
        %1349 = vmatpush1.bf16.xpose.msra.mxu0 0
        %1350 = vmatprep.subr.bf16.mxu0 0
        %1351 = vmatpush1.bf16.xpose.msra.mxu0 0
        %1352 = vmatprep.subr.bf16.mxu0 0
        %1353 = vmatpush1.bf16.xpose.msra.mxu0 0
        %1354 = vmatprep.subr.bf16.mxu0 0
        %1355 = vmatpush1.bf16.xpose.msra.mxu0 0
        %1356 = vmatprep.subr.bf16.mxu0 0
        %1357 = vmatpush1.bf16.xpose.msra.mxu0 0
        %1358 = vmatprep.subr.bf16.mxu0 0
        %1359 = vmatpush1.bf16.xpose.msra.mxu0 0
        %1360 = vmatprep.subr.bf16.mxu0 0
        %1361 = vmatpush1.bf16.xpose.msra.mxu0 0
        %1362 = vmatprep.subr.bf16.mxu0 0
        %1363 = vmatpush1.bf16.xpose.msra.mxu0 0
        %1364 = vmatprep.subr.bf16.mxu0 0
        %1365 = vmatpush1.bf16.xpose.msra.mxu0 0
        %1366 = vmatprep.subr.bf16.mxu0 0
        %1367 = vmatpush1.bf16.xpose.msra.mxu0 0
        %1368 = vmatprep.subr.bf16.mxu0 0
        %1369 = vmatpush1.bf16.xpose.msra.mxu0 0
        %1370 = vmatprep.mubr.bf16.mxu0 0
        %1371 = vmatmul.mubr.bf16.gmra.mrb[0].mxu0 %v1333
        %v1372 = vpop.f32.mrb[0].mxu0
        %v1373 = vadd.f32 %v981, %v1372
        %v1374 = vpop.f32.mrb[0].mxu0
        %v1375 = vpop.f32.mrb[0].mxu0
        %v1376 = vadd.f32 %v982, %v1375
        %v1377 = vpop.f32.mrb[0].mxu0
        %1378 = vdwg.mxu0
        %v1379 = vsel %vm1039, %v1373, -inf
        %1380 = vmax.xlane.f32.xlu0 %v1379
        %v1381 = vpop.xlane.xlu0 %1380
        %v1382 = vsel %vm1039, %v1376, -inf
        %1383 = vmax.xlane.f32.xlu0 %v1382
        %v1384 = vpop.xlane.xlu0 %1383
        %v1385 = vsub.f32 %v1373, %v1381
        %v1386 = vsub.f32 %v1376, %v1384
        %v1387 = vmul.f32 %v1385, 1.442695
        %v1388 = vpow.pop %v1387
        %v1389 = vmul.f32 %v1386, 1.442695
        %v1390 = vpow.pop %v1389
        %v1391 = vsel %vm1039, %v1388, 0.0
        %1392 = vadd.xlane.f32.xlu0 %v1391
        %v1393 = vpop.xlane.xlu0 %1392
        %v1394 = vsel %vm1039, %v1390, 0.0
        %1395 = vadd.xlane.f32.xlu0 %v1394
        %v1396 = vpop.xlane.xlu0 %1395
        %v1397 = vrcp.pop %v1393
        %v1398 = vrcp.pop %v1396
        %v1399 = vmul.f32 %v1388, %v1397
        %v1400 = vmul.f32 %v1390, %v1398
        %v1401 = vpack.c.bf16 %v1400, %v1399
        %1402 = vrot.lane.b32.xlu0 %v987, 48
        %v1403 = vpop.permute.xlu0 %1402
        %v1406 = vsel %vm1039, %v1401, 0
        %1408 = vmatprep.subr.bf16.mxu0 0
        %1409 = vmatpush1.bf16.msra.mxu0 %v1403
        %1410 = vmatprep.subr.bf16.mxu0 0
        %1411 = vmatpush1.bf16.msra.mxu0 0
        %1412 = vmatprep.subr.bf16.mxu0 0
        %1413 = vmatpush1.bf16.msra.mxu0 0
        %1414 = vmatprep.subr.bf16.mxu0 0
        %1415 = vmatpush1.bf16.msra.mxu0 0
        %1416 = vmatprep.subr.bf16.mxu0 0
        %1417 = vmatpush1.bf16.msra.mxu0 0
        %1418 = vmatprep.subr.bf16.mxu0 0
        %1419 = vmatpush1.bf16.msra.mxu0 0
        %1420 = vmatprep.subr.bf16.mxu0 0
        %1421 = vmatpush1.bf16.msra.mxu0 0
        %1422 = vmatprep.subr.bf16.mxu0 0
        %1423 = vmatpush1.bf16.msra.mxu0 0
        %1424 = vmatprep.subr.bf16.mxu0 0
        %1425 = vmatpush1.bf16.msra.mxu0 0
        %1426 = vmatprep.subr.bf16.mxu0 0
        %1427 = vmatpush1.bf16.msra.mxu0 0
        %1428 = vmatprep.subr.bf16.mxu0 0
        %1429 = vmatpush1.bf16.msra.mxu0 0
        %1430 = vmatprep.subr.bf16.mxu0 0
        %1431 = vmatpush1.bf16.msra.mxu0 0
        %1432 = vmatprep.subr.bf16.mxu0 0
        %1433 = vmatpush1.bf16.msra.mxu0 0
        %1434 = vmatprep.subr.bf16.mxu0 0
        %1435 = vmatpush1.bf16.msra.mxu0 0
        %1436 = vmatprep.subr.bf16.mxu0 0
        %1437 = vmatpush1.bf16.msra.mxu0 0
        %1438 = vmatprep.subr.bf16.mxu0 0
        %1439 = vmatpush1.bf16.msra.mxu0 0
        %1440 = vmatprep.mubr.bf16.mxu0 0
        %1441 = vmatmul.mubr.bf16.gmra.mrb[0].mxu0 %v1406
        %v1442 = vpop.f32.mrb[0].mxu0
        %v1443 = vadd.f32 0.0, %v1442
        %v1444 = vpop.f32.mrb[0].mxu0
        %v1445 = vpop.f32.mrb[0].mxu0
        %v1446 = vadd.f32 0.0, %v1445
        %v1447 = vpop.f32.mrb[0].mxu0
        %1448 = vdwg.mxu0
        %v1449 = vpack.c.bf16 %v1446, %v1443
        %v1451 = vsel %vm991, %v1449, 0
        %v1454 = vsel %vm1236, %v985, 0
        %1456 = vmatprep.subr.bf16.mxu0 0
        %1457 = vmatpush1.bf16.msra.mxu0 %v1454
        %1458 = vmatprep.subr.bf16.mxu0 0
        %1459 = vmatpush1.bf16.msra.mxu0 0
        %1460 = vmatprep.subr.bf16.mxu0 0
        %1461 = vmatpush1.bf16.msra.mxu0 0
        %1462 = vmatprep.subr.bf16.mxu0 0
        %1463 = vmatpush1.bf16.msra.mxu0 0
        %1464 = vmatprep.subr.bf16.mxu0 0
        %1465 = vmatpush1.bf16.msra.mxu0 0
        %1466 = vmatprep.subr.bf16.mxu0 0
        %1467 = vmatpush1.bf16.msra.mxu0 0
        %1468 = vmatprep.subr.bf16.mxu0 0
        %1469 = vmatpush1.bf16.msra.mxu0 0
        %1470 = vmatprep.subr.bf16.mxu0 0
        %1471 = vmatpush1.bf16.msra.mxu0 0
        %1472 = vmatprep.subr.bf16.mxu0 0
        %1473 = vmatpush1.bf16.msra.mxu0 0
        %1474 = vmatprep.subr.bf16.mxu0 0
        %1475 = vmatpush1.bf16.msra.mxu0 0
        %1476 = vmatprep.subr.bf16.mxu0 0
        %1477 = vmatpush1.bf16.msra.mxu0 0
        %1478 = vmatprep.subr.bf16.mxu0 0
        %1479 = vmatpush1.bf16.msra.mxu0 0
        %1480 = vmatprep.subr.bf16.mxu0 0
        %1481 = vmatpush1.bf16.msra.mxu0 0
        %1482 = vmatprep.subr.bf16.mxu0 0
        %1483 = vmatpush1.bf16.msra.mxu0 0
        %1484 = vmatprep.subr.bf16.mxu0 0
        %1485 = vmatpush1.bf16.msra.mxu0 0
        %1486 = vmatprep.subr.bf16.mxu0 0
        %1487 = vmatpush1.bf16.msra.mxu0 0
        %1488 = vmatprep.mubr.bf16.mxu0 0
        %1489 = vmatmul.mubr.bf16.gmra.mrb[0].mxu0 %v1451
        %v1490 = vpop.f32.mrb[0].mxu0
        %v1491 = vadd.f32 0.0, %v1490
        %v1492 = vpop.f32.mrb[0].mxu0
        %v1493 = vpop.f32.mrb[0].mxu0
        %v1494 = vadd.f32 0.0, %v1493
        %v1495 = vpop.f32.mrb[0].mxu0
        %1496 = vdwg.mxu0
        %v1497 = vadd.f32 %v1322, %v1491
        %v1498 = vadd.f32 %v1325, %v1494
        %1499 = vrot.lane.b32.xlu0 %v987, 104
        %v1500 = vpop.permute.xlu0 %1499
        %1501 = vrot.lane.b32.xlu0 %v987, 72
        %v1502 = vpop.permute.xlu0 %1501
        %v1504 = vsel %vm991, %v1500, 0
        %v1507 = vsel %vm991, %v1502, 0
        %1509 = vmatprep.subr.bf16.mxu0 0
        %1510 = vmatpush1.bf16.xpose.msra.mxu0 %v1507
        %1511 = vmatprep.subr.bf16.mxu0 0
        %1512 = vmatpush1.bf16.xpose.msra.mxu0 0
        %1513 = vmatprep.subr.bf16.mxu0 0
        %1514 = vmatpush1.bf16.xpose.msra.mxu0 0
        %1515 = vmatprep.subr.bf16.mxu0 0
        %1516 = vmatpush1.bf16.xpose.msra.mxu0 0
        %1517 = vmatprep.subr.bf16.mxu0 0
        %1518 = vmatpush1.bf16.xpose.msra.mxu0 0
        %1519 = vmatprep.subr.bf16.mxu0 0
        %1520 = vmatpush1.bf16.xpose.msra.mxu0 0
        %1521 = vmatprep.subr.bf16.mxu0 0
        %1522 = vmatpush1.bf16.xpose.msra.mxu0 0
        %1523 = vmatprep.subr.bf16.mxu0 0
        %1524 = vmatpush1.bf16.xpose.msra.mxu0 0
        %1525 = vmatprep.subr.bf16.mxu0 0
        %1526 = vmatpush1.bf16.xpose.msra.mxu0 0
        %1527 = vmatprep.subr.bf16.mxu0 0
        %1528 = vmatpush1.bf16.xpose.msra.mxu0 0
        %1529 = vmatprep.subr.bf16.mxu0 0
        %1530 = vmatpush1.bf16.xpose.msra.mxu0 0
        %1531 = vmatprep.subr.bf16.mxu0 0
        %1532 = vmatpush1.bf16.xpose.msra.mxu0 0
        %1533 = vmatprep.subr.bf16.mxu0 0
        %1534 = vmatpush1.bf16.xpose.msra.mxu0 0
        %1535 = vmatprep.subr.bf16.mxu0 0
        %1536 = vmatpush1.bf16.xpose.msra.mxu0 0
        %1537 = vmatprep.subr.bf16.mxu0 0
        %1538 = vmatpush1.bf16.xpose.msra.mxu0 0
        %1539 = vmatprep.subr.bf16.mxu0 0
        %1540 = vmatpush1.bf16.xpose.msra.mxu0 0
        %1541 = vmatprep.mubr.bf16.mxu0 0
        %1542 = vmatmul.mubr.bf16.gmra.mrb[0].mxu0 %v1504
        %v1543 = vpop.f32.mrb[0].mxu0
        %v1544 = vadd.f32 %v981, %v1543
        %v1545 = vpop.f32.mrb[0].mxu0
        %v1546 = vpop.f32.mrb[0].mxu0
        %v1547 = vadd.f32 %v982, %v1546
        %v1548 = vpop.f32.mrb[0].mxu0
        %1549 = vdwg.mxu0
        %v1550 = vsel %vm1039, %v1544, -inf
        %1551 = vmax.xlane.f32.xlu0 %v1550
        %v1552 = vpop.xlane.xlu0 %1551
        %v1553 = vsel %vm1039, %v1547, -inf
        %1554 = vmax.xlane.f32.xlu0 %v1553
        %v1555 = vpop.xlane.xlu0 %1554
        %v1556 = vsub.f32 %v1544, %v1552
        %v1557 = vsub.f32 %v1547, %v1555
        %v1558 = vmul.f32 %v1556, 1.442695
        %v1559 = vpow.pop %v1558
        %v1560 = vmul.f32 %v1557, 1.442695
        %v1561 = vpow.pop %v1560
        %v1562 = vsel %vm1039, %v1559, 0.0
        %1563 = vadd.xlane.f32.xlu0 %v1562
        %v1564 = vpop.xlane.xlu0 %1563
        %v1565 = vsel %vm1039, %v1561, 0.0
        %1566 = vadd.xlane.f32.xlu0 %v1565
        %v1567 = vpop.xlane.xlu0 %1566
        %v1568 = vrcp.pop %v1564
        %v1569 = vrcp.pop %v1567
        %v1570 = vmul.f32 %v1559, %v1568
        %v1571 = vmul.f32 %v1561, %v1569
        %v1572 = vpack.c.bf16 %v1571, %v1570
        %1573 = vrot.lane.b32.xlu0 %v987, 40
        %v1574 = vpop.permute.xlu0 %1573
        %v1577 = vsel %vm1039, %v1572, 0
        %1579 = vmatprep.subr.bf16.mxu0 0
        %1580 = vmatpush1.bf16.msra.mxu0 %v1574
        %1581 = vmatprep.subr.bf16.mxu0 0
        %1582 = vmatpush1.bf16.msra.mxu0 0
        %1583 = vmatprep.subr.bf16.mxu0 0
        %1584 = vmatpush1.bf16.msra.mxu0 0
        %1585 = vmatprep.subr.bf16.mxu0 0
        %1586 = vmatpush1.bf16.msra.mxu0 0
        %1587 = vmatprep.subr.bf16.mxu0 0
        %1588 = vmatpush1.bf16.msra.mxu0 0
        %1589 = vmatprep.subr.bf16.mxu0 0
        %1590 = vmatpush1.bf16.msra.mxu0 0
        %1591 = vmatprep.subr.bf16.mxu0 0
        %1592 = vmatpush1.bf16.msra.mxu0 0
        %1593 = vmatprep.subr.bf16.mxu0 0
        %1594 = vmatpush1.bf16.msra.mxu0 0
        %1595 = vmatprep.subr.bf16.mxu0 0
        %1596 = vmatpush1.bf16.msra.mxu0 0
        %1597 = vmatprep.subr.bf16.mxu0 0
        %1598 = vmatpush1.bf16.msra.mxu0 0
        %1599 = vmatprep.subr.bf16.mxu0 0
        %1600 = vmatpush1.bf16.msra.mxu0 0
        %1601 = vmatprep.subr.bf16.mxu0 0
        %1602 = vmatpush1.bf16.msra.mxu0 0
        %1603 = vmatprep.subr.bf16.mxu0 0
        %1604 = vmatpush1.bf16.msra.mxu0 0
        %1605 = vmatprep.subr.bf16.mxu0 0
        %1606 = vmatpush1.bf16.msra.mxu0 0
        %1607 = vmatprep.subr.bf16.mxu0 0
        %1608 = vmatpush1.bf16.msra.mxu0 0
        %1609 = vmatprep.subr.bf16.mxu0 0
        %1610 = vmatpush1.bf16.msra.mxu0 0
        %1611 = vmatprep.mubr.bf16.mxu0 0
        %1612 = vmatmul.mubr.bf16.gmra.mrb[0].mxu0 %v1577
        %v1613 = vpop.f32.mrb[0].mxu0
        %v1614 = vadd.f32 0.0, %v1613
        %v1615 = vpop.f32.mrb[0].mxu0
        %v1616 = vpop.f32.mrb[0].mxu0
        %v1617 = vadd.f32 0.0, %v1616
        %v1618 = vpop.f32.mrb[0].mxu0
        %1619 = vdwg.mxu0
        %v1620 = vpack.c.bf16 %v1617, %v1614
        %v1622 = vsel %vm991, %v1620, 0
        %v1625 = vsel %vm1236, %v986, 0
        %1627 = vmatprep.subr.bf16.mxu0 0
        %1628 = vmatpush1.bf16.msra.mxu0 %v1625
        %1629 = vmatprep.subr.bf16.mxu0 0
        %1630 = vmatpush1.bf16.msra.mxu0 0
        %1631 = vmatprep.subr.bf16.mxu0 0
        %1632 = vmatpush1.bf16.msra.mxu0 0
        %1633 = vmatprep.subr.bf16.mxu0 0
        %1634 = vmatpush1.bf16.msra.mxu0 0
        %1635 = vmatprep.subr.bf16.mxu0 0
        %1636 = vmatpush1.bf16.msra.mxu0 0
        %1637 = vmatprep.subr.bf16.mxu0 0
        %1638 = vmatpush1.bf16.msra.mxu0 0
        %1639 = vmatprep.subr.bf16.mxu0 0
        %1640 = vmatpush1.bf16.msra.mxu0 0
        %1641 = vmatprep.subr.bf16.mxu0 0
        %1642 = vmatpush1.bf16.msra.mxu0 0
        %1643 = vmatprep.subr.bf16.mxu0 0
        %1644 = vmatpush1.bf16.msra.mxu0 0
        %1645 = vmatprep.subr.bf16.mxu0 0
        %1646 = vmatpush1.bf16.msra.mxu0 0
        %1647 = vmatprep.subr.bf16.mxu0 0
        %1648 = vmatpush1.bf16.msra.mxu0 0
        %1649 = vmatprep.subr.bf16.mxu0 0
        %1650 = vmatpush1.bf16.msra.mxu0 0
        %1651 = vmatprep.subr.bf16.mxu0 0
        %1652 = vmatpush1.bf16.msra.mxu0 0
        %1653 = vmatprep.subr.bf16.mxu0 0
        %1654 = vmatpush1.bf16.msra.mxu0 0
        %1655 = vmatprep.subr.bf16.mxu0 0
        %1656 = vmatpush1.bf16.msra.mxu0 0
        %1657 = vmatprep.subr.bf16.mxu0 0
        %1658 = vmatpush1.bf16.msra.mxu0 0
        %1659 = vmatprep.mubr.bf16.mxu0 0
        %1660 = vmatmul.mubr.bf16.gmra.mrb[0].mxu0 %v1622
        %v1661 = vpop.f32.mrb[0].mxu0
        %v1662 = vadd.f32 0.0, %v1661
        %v1663 = vpop.f32.mrb[0].mxu0
        %v1664 = vpop.f32.mrb[0].mxu0
        %v1665 = vadd.f32 0.0, %v1664
        %v1666 = vpop.f32.mrb[0].mxu0
        %1667 = vdwg.mxu0
        %v1668 = vadd.f32 %v1497, %v1662
        %v1669 = vadd.f32 %v1498, %v1665
        %v1670 = vld [vmem:[%s764] sm:$0x1]
        %v1672 = vlaneseq
        %v1673 = vshrl.u32 %v1672, 7
        %v1674 = vsub.s32 0, %v1673
        %v1675 = vrot.slane %v1670, %v1674
        %v1677 = vadd.f32 %v1668, %v1675
        %v1678 = vadd.f32 %v1669, %v1675
        %v1679 = vadd.f32 %v1677, %v910
        %v1680 = vadd.f32 %v1678, %v911
        %v1681 = vld [vmem:[%s767] sm:$0x1]
        %v1682 = vld [vmem:[%s770] sm:$0x1]
        %v1683 = vsel %vm936, %v1679, 0.0
        %1684 = vadd.xlane.f32.xlu0 %v1683
        %v1685 = vpop.xlane.xlu0 %1684
        %v1686 = vsel %vm936, %v1680, 0.0
        %1687 = vadd.xlane.f32.xlu0 %v1686
        %v1688 = vpop.xlane.xlu0 %1687
        %v1689 = vrcp.pop 32.0
        %v1690 = vmul.f32 %v1685, %v1689
        %v1691 = vmul.f32 %v1688, %v1689
        %v1692 = vsub.f32 %v1679, %v1690
        %v1693 = vsub.f32 %v1680, %v1691
        %v1694 = vmul.f32 %v1692, %v1692
        %v1695 = vmul.f32 %v1693, %v1693
        %v1696 = vsel %vm936, %v1694, 0.0
        %1697 = vadd.xlane.f32.xlu0 %v1696
        %v1698 = vpop.xlane.xlu0 %1697
        %v1699 = vsel %vm936, %v1695, 0.0
        %1700 = vadd.xlane.f32.xlu0 %v1699
        %v1701 = vpop.xlane.xlu0 %1700
        %v1702 = vmul.f32 %v1698, %v1689
        %v1703 = vmul.f32 %v1701, %v1689
        %v1704 = vadd.f32 %v1702, 1e-12
        %v1705 = vadd.f32 %v1703, 1e-12
        %v1706 = vrsqrt.pop %v1704
        %v1707 = vrsqrt.pop %v1705
        %v1708 = vmul.f32 %v1692, %v1706
        %v1709 = vmul.f32 %v1693, %v1707
        %v1711 = vlaneseq
        %v1712 = vshrl.u32 %v1711, 7
        %v1713 = vsub.s32 0, %v1712
        %v1714 = vrot.slane %v1681, %v1713
        %v1716 = vmul.f32 %v1708, %v1714
        %v1717 = vmul.f32 %v1709, %v1714
        %v1719 = vlaneseq
        %v1720 = vshrl.u32 %v1719, 7
        %v1721 = vsub.s32 0, %v1720
        %v1722 = vrot.slane %v1682, %v1721
        %v1724 = vadd.f32 %v1716, %v1722
        %v1725 = vadd.f32 %v1717, %v1722
        %v1726 = vld [vmem:[%s775] sm:$0xf]
        %v1727 = vld [vmem:[%s775 + $0x4] sm:$0xf]
        %v1728 = vld [vmem:[%s775 + $0x8] sm:$0xf]
        %v1729 = vld [vmem:[%s775 + $0xc] sm:$0xf]
        %v1730 = vpack.c.bf16 %v1725, %v1724
        %v1731 = vld [vmem:[%s778] sm:$0x1]
        %v1733 = vlaneseq
        %v1734 = vshrl.u32 %v1733, 7
        %v1735 = vsub.s32 0, %v1734
        %v1736 = vrot.slane %v1731, %v1735
        %v1742 = vunpack.c.l.b16 %v1726
        %v1743 = vunpack.c.l.b16 %v1727
        %v1744 = vunpack.c.l.b16 %v1728
        %v1745 = vunpack.c.l.b16 %v1729
        %v1746 = vpack.c.b16 %v1743, %v1742
        %v1747 = vpack.c.b16 %v1745, %v1744
        %v1751 = vsel %vm936, %v1730, 0
        %1753 = vmatprep.subr.bf16.mxu0 0
        %1754 = vmatpush1.bf16.msra.mxu0 %v1746
        %1755 = vmatprep.subr.bf16.mxu0 0
        %1756 = vmatpush1.bf16.msra.mxu0 %v1747
        %1757 = vmatprep.subr.bf16.mxu0 0
        %1758 = vmatpush1.bf16.msra.mxu0 0
        %1759 = vmatprep.subr.bf16.mxu0 0
        %1760 = vmatpush1.bf16.msra.mxu0 0
        %1761 = vmatprep.subr.bf16.mxu0 0
        %1762 = vmatpush1.bf16.msra.mxu0 0
        %1763 = vmatprep.subr.bf16.mxu0 0
        %1764 = vmatpush1.bf16.msra.mxu0 0
        %1765 = vmatprep.subr.bf16.mxu0 0
        %1766 = vmatpush1.bf16.msra.mxu0 0
        %1767 = vmatprep.subr.bf16.mxu0 0
        %1768 = vmatpush1.bf16.msra.mxu0 0
        %1769 = vmatprep.subr.bf16.mxu0 0
        %1770 = vmatpush1.bf16.msra.mxu0 0
        %1771 = vmatprep.subr.bf16.mxu0 0
        %1772 = vmatpush1.bf16.msra.mxu0 0
        %1773 = vmatprep.subr.bf16.mxu0 0
        %1774 = vmatpush1.bf16.msra.mxu0 0
        %1775 = vmatprep.subr.bf16.mxu0 0
        %1776 = vmatpush1.bf16.msra.mxu0 0
        %1777 = vmatprep.subr.bf16.mxu0 0
        %1778 = vmatpush1.bf16.msra.mxu0 0
        %1779 = vmatprep.subr.bf16.mxu0 0
        %1780 = vmatpush1.bf16.msra.mxu0 0
        %1781 = vmatprep.subr.bf16.mxu0 0
        %1782 = vmatpush1.bf16.msra.mxu0 0
        %1783 = vmatprep.subr.bf16.mxu0 0
        %1784 = vmatpush1.bf16.msra.mxu0 0
        %1785 = vmatprep.mubr.bf16.mxu0 0
        %1786 = vmatmul.mubr.bf16.gmra.mrb[0].mxu0 %v1751
        %v1787 = vpop.f32.mrb[0].mxu0
        %v1788 = vadd.f32 %v1736, %v1787
        %v1789 = vpop.f32.mrb[0].mxu0
        %v1790 = vpop.f32.mrb[0].mxu0
        %v1791 = vadd.f32 %v1736, %v1790
        %v1792 = vpop.f32.mrb[0].mxu0
        %1793 = vdwg.mxu0
        %v1794 = vmul.f32 %v1788, 0.5
        %v1795 = vmul.f32 %v1791, 0.5
        %v1796 = vmul.f32 %v1788, 0.044715
        %v1797 = vmul.f32 %v1791, 0.044715
        %v1798 = vmul.f32 %v1796, %v1788
        %v1799 = vmul.f32 %v1797, %v1791
        %v1800 = vmul.f32 %v1798, %v1788
        %v1801 = vmul.f32 %v1799, %v1791
        %v1802 = vadd.f32 %v1788, %v1800
        %v1803 = vadd.f32 %v1791, %v1801
        %v1804 = vmul.f32 %v1802, 0.7978846
        %v1805 = vmul.f32 %v1803, 0.7978846
        %v1806 = vtanh.pop %v1804
        %v1807 = vtanh.pop %v1805
        %v1808 = vadd.f32 %v1806, 1.0
        %v1809 = vadd.f32 %v1807, 1.0
        %v1810 = vmul.f32 %v1794, %v1808
        %v1811 = vmul.f32 %v1795, %v1809
        %v1812 = vld [vmem:[%s783] sm:$0xf]
        %v1813 = vld [vmem:[%s783 + $0x4] sm:$0xf]
        %v1814 = vld [vmem:[%s783 + $0x8] sm:$0xf]
        %v1815 = vld [vmem:[%s783 + $0xc] sm:$0xf]
        %v1816 = vld [vmem:[%s783 + $0x10] sm:$0xf]
        %v1817 = vld [vmem:[%s783 + $0x14] sm:$0xf]
        %v1818 = vld [vmem:[%s783 + $0x18] sm:$0xf]
        %v1819 = vld [vmem:[%s783 + $0x1c] sm:$0xf]
        %v1820 = vpack.c.bf16 %v1811, %v1810
        %v1821 = vld [vmem:[%s786] sm:$0x1]
        %v1823 = vlaneseq
        %v1824 = vshrl.u32 %v1823, 7
        %v1825 = vsub.s32 0, %v1824
        %v1826 = vrot.slane %v1821, %v1825
        %v1836 = vunpack.c.l.b16 %v1812
        %v1837 = vunpack.c.l.b16 %v1813
        %v1838 = vunpack.c.l.b16 %v1814
        %v1839 = vunpack.c.l.b16 %v1815
        %v1840 = vunpack.c.l.b16 %v1816
        %v1841 = vunpack.c.l.b16 %v1817
        %v1842 = vunpack.c.l.b16 %v1818
        %v1843 = vunpack.c.l.b16 %v1819
        %v1844 = vpack.c.b16 %v1837, %v1836
        %v1845 = vpack.c.b16 %v1839, %v1838
        %v1846 = vpack.c.b16 %v1841, %v1840
        %v1847 = vpack.c.b16 %v1843, %v1842
        %vm1852 = vcmask 523264
        %v1854 = vsel %vm1852, %v1820, 0
        %1856 = vmatprep.subr.bf16.mxu0 0
        %1857 = vmatpush1.bf16.msra.mxu0 %v1844
        %1858 = vmatprep.subr.bf16.mxu0 0
        %1859 = vmatpush1.bf16.msra.mxu0 %v1845
        %1860 = vmatprep.subr.bf16.mxu0 0
        %1861 = vmatpush1.bf16.msra.mxu0 %v1846
        %1862 = vmatprep.subr.bf16.mxu0 0
        %1863 = vmatpush1.bf16.msra.mxu0 %v1847
        %1864 = vmatprep.subr.bf16.mxu0 0
        %1865 = vmatpush1.bf16.msra.mxu0 0
        %1866 = vmatprep.subr.bf16.mxu0 0
        %1867 = vmatpush1.bf16.msra.mxu0 0
        %1868 = vmatprep.subr.bf16.mxu0 0
        %1869 = vmatpush1.bf16.msra.mxu0 0
        %1870 = vmatprep.subr.bf16.mxu0 0
        %1871 = vmatpush1.bf16.msra.mxu0 0
        %1872 = vmatprep.subr.bf16.mxu0 0
        %1873 = vmatpush1.bf16.msra.mxu0 0
        %1874 = vmatprep.subr.bf16.mxu0 0
        %1875 = vmatpush1.bf16.msra.mxu0 0
        %1876 = vmatprep.subr.bf16.mxu0 0
        %1877 = vmatpush1.bf16.msra.mxu0 0
        %1878 = vmatprep.subr.bf16.mxu0 0
        %1879 = vmatpush1.bf16.msra.mxu0 0
        %1880 = vmatprep.subr.bf16.mxu0 0
        %1881 = vmatpush1.bf16.msra.mxu0 0
        %1882 = vmatprep.subr.bf16.mxu0 0
        %1883 = vmatpush1.bf16.msra.mxu0 0
        %1884 = vmatprep.subr.bf16.mxu0 0
        %1885 = vmatpush1.bf16.msra.mxu0 0
        %1886 = vmatprep.subr.bf16.mxu0 0
        %1887 = vmatpush1.bf16.msra.mxu0 0
        %1888 = vmatprep.mubr.bf16.mxu0 0
        %1889 = vmatmul.mubr.bf16.gmra.mrb[0].mxu0 %v1854
        %v1890 = vpop.f32.mrb[0].mxu0
        %v1891 = vadd.f32 %v1826, %v1890
        %v1892 = vpop.f32.mrb[0].mxu0
        %v1893 = vpop.f32.mrb[0].mxu0
        %v1894 = vadd.f32 %v1826, %v1893
        %v1895 = vpop.f32.mrb[0].mxu0
        %1896 = vdwg.mxu0
        %v1897 = vadd.f32 %v1891, %v1724
        %v1898 = vadd.f32 %v1894, %v1725
        %v1899 = vld [vmem:[%s789] sm:$0x1]
        %v1900 = vld [vmem:[%s792] sm:$0x1]
        %v1901 = vsel %vm936, %v1897, 0.0
        %1902 = vadd.xlane.f32.xlu0 %v1901
        %v1903 = vpop.xlane.xlu0 %1902
        %v1904 = vsel %vm936, %v1898, 0.0
        %1905 = vadd.xlane.f32.xlu0 %v1904
        %v1906 = vpop.xlane.xlu0 %1905
        %v1907 = vmul.f32 %v1903, %v1689
        %v1908 = vmul.f32 %v1906, %v1689
        %v1909 = vsub.f32 %v1897, %v1907
        %v1910 = vsub.f32 %v1898, %v1908
        %v1911 = vmul.f32 %v1909, %v1909
        %v1912 = vmul.f32 %v1910, %v1910
        %v1913 = vsel %vm936, %v1911, 0.0
        %1914 = vadd.xlane.f32.xlu0 %v1913
        %v1915 = vpop.xlane.xlu0 %1914
        %v1916 = vsel %vm936, %v1912, 0.0
        %1917 = vadd.xlane.f32.xlu0 %v1916
        %v1918 = vpop.xlane.xlu0 %1917
        %v1919 = vmul.f32 %v1915, %v1689
        %v1920 = vmul.f32 %v1918, %v1689
        %v1921 = vadd.f32 %v1919, 1e-12
        %v1922 = vadd.f32 %v1920, 1e-12
        %v1923 = vrsqrt.pop %v1921
        %v1924 = vrsqrt.pop %v1922
        %v1925 = vmul.f32 %v1909, %v1923
        %v1926 = vmul.f32 %v1910, %v1924
        %v1928 = vlaneseq
        %v1929 = vshrl.u32 %v1928, 7
        %v1930 = vsub.s32 0, %v1929
        %v1931 = vrot.slane %v1899, %v1930
        %v1933 = vmul.f32 %v1925, %v1931
        %v1934 = vmul.f32 %v1926, %v1931
        %v1936 = vlaneseq
        %v1937 = vshrl.u32 %v1936, 7
        %v1938 = vsub.s32 0, %v1937
        %v1939 = vrot.slane %v1900, %v1938
        %v1941 = vadd.f32 %v1933, %v1939
        %v1942 = vadd.f32 %v1934, %v1939
        %1943 = vst.msk [vmem:[#allocation2] sm:$0xff] %vm936, %v1941
        %1944 = vst.msk [vmem:[#allocation2 + $0x8] sm:$0xff] %vm936, %v1942
        // Predicated region
        $region97: #{albert_unshared_forward.1} parent=91 // pred_check
          %p1945 = pneg %p508
        $region98: #{albert_unshared_forward.1} parent=91 // pred_check_branch
          %1947 = sbr.rel (%p1945) target = $region100
        $region99: #{albert_unshared_forward.1} parent=91 // pred_region
          %s1948 = smul.u32 2, %s34
          %s1950 = ssub.s32 256, 256
          %1951 = vsyncadd [#allocation3], %s1950
          %s1952 = smul.addr %s1948, 128
          %s1953 = scalar_lea.hbm %s18, %s1952
          %s1954 = sshll.u32 [#allocation2], 4
          %s1955 = int_to_ptr.vmem [resolvable:$true] %s1954
          %1960 = dma.vmem_to_hbm [thread:$0]  %s1955, 256, %s1953, [#allocation3], 128, 128, 8
        $region100: #{albert_unshared_forward.1} parent=91 // pred_fallthru
          _
        // Predicated region
        $region101: #{albert_unshared_forward.1} parent=91 // pred_check
          %p1961 = pneg %p508
        $region102: #{albert_unshared_forward.1} parent=91 // pred_check_branch
          %1963 = sbr.rel (%p1961) target = $region104
        $region103: #{albert_unshared_forward.1} parent=91 // pred_region
          %1964 = dma.done [#allocation3], 256
        $region104: #{albert_unshared_forward.1} parent=91 // pred_fallthru
          _
      $region92: #{albert_unshared_forward.1} parent=5 // pred_fallthru
        _
      %p1965 = scmp.le.s32.totalorder 2, %s25
      // Predicated region
      $region105: #{albert_unshared_forward.1} parent=5 // pred_check
        %p1966 = pneg %p1965
      $region106: #{albert_unshared_forward.1} parent=5 // pred_check_branch
        %1968 = sbr.rel (%p1966) target = $region108
      $region107: #{albert_unshared_forward.1} parent=5 // pred_region
        %s1969 = ssub.s32 %s25, 2
      $region108: #{albert_unshared_forward.1} parent=5 // pred_fallthru
        _
    $region6: #{albert_unshared_forward.1} parent=1 // loop_footer
      %s29 = sadd.s32 1, %s25
    $region7: #{albert_unshared_forward.1} parent=1 // loop_footer_branch
      %24 = sbr.rel target = $region3
    $region8: #{albert_unshared_forward.1} parent=1 // loop_exit
      _
    %1970 = vsyncpa [#allocation3], 1
    %s1971 = scalar_lea.sflag [#allocation3], 1
    %1972 = vsyncpa %s1971, 1

</llo_original>
